<compile_context>
chip_gen: v6e
topology: v6e:2x2x1
jax: 0.10.0
libtpu: 0.0.40
codegen_flags: <defaults>
</compile_context>

<pallas_src>
import functools

import jax
import jax.numpy as jnp
from jax import lax
from jax.experimental import pallas as pl
from jax.experimental.pallas import tpu as pltpu


CONFIG = {
    "rnn": "gru",
    "bidirectional": False,
    "input_dim": 16,
    "hidden_dim": 32,
    "drop_rate": 0.1,   # nn.GRU dropout only applies between layers; 1 layer => identity
}

GATE_PAD = 128  # lane-padded width of the concatenated r|z|n gate block (3H = 96 -> 128)


# ----------------------------- Pallas kernel ---------------------------------
def _gru_seq_kernel(x_ref, wih_ref, bih_ref, whh_ref, bhh_ref, o_ref):
    """Full GRU recurrence for one batch block, whole sequence resident in VMEM.

    x_ref  : (T, Bb, D)   time-major inputs
    wih_ref: (D, 128)     [W_ir | W_iz | W_in].T, zero-padded on the lane dim
    bih_ref: (1, 128)     b_ih zero-padded
    whh_ref: (H, 128)     [W_hr | W_hz | W_hn].T, zero-padded on the lane dim
    bhh_ref: (1, 128)     b_hh zero-padded
    o_ref  : (T, Bb, H)   time-major hidden states (the GRU output sequence)
    """
    T = x_ref.shape[0]
    Bb = x_ref.shape[1]
    H = o_ref.shape[2]

    wih = wih_ref[...]
    bih = bih_ref[...]
    whh = whh_ref[...]
    bhh = bhh_ref[...]

    def step(t, h):
        # One fused matmul per projection: all three gates in one 128-lane slab.
        gi = jnp.dot(x_ref[t], wih, preferred_element_type=jnp.float32) + bih
        gh = jnp.dot(h, whh, preferred_element_type=jnp.float32) + bhh
        r = jax.nn.sigmoid(gi[:, 0:H] + gh[:, 0:H])
        z = jax.nn.sigmoid(gi[:, H:2 * H] + gh[:, H:2 * H])
        n = jnp.tanh(gi[:, 2 * H:3 * H] + r * gh[:, 2 * H:3 * H])
        h_new = (1.0 - z) * n + z * h
        o_ref[t] = h_new
        return h_new

    h0 = jnp.zeros((Bb, H), jnp.float32)
    lax.fori_loop(0, T, step, h0, unroll=True)


# ----------------------------- wrapper ---------------------------------------
def gru_forward(x, w_ih, b_ih, w_hh, b_hh):
    """PyTorch-compatible single-layer unidirectional GRU.

    x: (B, T, D) batch-first.  Weights use the PyTorch layout:
    w_ih (3H, D), w_hh (3H, H), gate order [r, z, n].  Returns (B, T, H).
    """
    B, T, D = x.shape
    H = w_hh.shape[1]
    assert w_ih.shape == (3 * H, D) and w_hh.shape == (3 * H, H)
    assert 3 * H <= GATE_PAD

    pad = GATE_PAD - 3 * H
    wih_p = jnp.pad(w_ih.T.astype(jnp.float32), ((0, 0), (0, pad)))        # (D, 128)
    whh_p = jnp.pad(w_hh.T.astype(jnp.float32), ((0, 0), (0, pad)))        # (H, 128)
    bih_p = jnp.pad(b_ih.astype(jnp.float32)[None, :], ((0, 0), (0, pad))) # (1, 128)
    bhh_p = jnp.pad(b_hh.astype(jnp.float32)[None, :], ((0, 0), (0, pad))) # (1, 128)

    xt = jnp.transpose(x, (1, 0, 2)).astype(jnp.float32)                   # (T, B, D)

    # Batch is the only grid axis; each block is an independent recurrence, so
    # it is safe to mark "parallel" (v7x can shard blocks across TensorCores).
    bb = B                       # whole batch in one block; everything fits VMEM
    grid = (pl.cdiv(B, bb),)

    out_t = pl.pallas_call(
        _gru_seq_kernel,
        grid=grid,
        in_specs=[
            pl.BlockSpec((T, bb, D), lambda i: (0, i, 0)),
            pl.BlockSpec((D, GATE_PAD), lambda i: (0, 0)),
            pl.BlockSpec((1, GATE_PAD), lambda i: (0, 0)),
            pl.BlockSpec((H, GATE_PAD), lambda i: (0, 0)),
            pl.BlockSpec((1, GATE_PAD), lambda i: (0, 0)),
        ],
        out_specs=pl.BlockSpec((T, bb, H), lambda i: (0, i, 0)),
        out_shape=jax.ShapeDtypeStruct((T, B, H), jnp.float32),
        compiler_params=pltpu.CompilerParams(
            dimension_semantics=("parallel",)),
    )(xt, wih_p, bih_p, whh_p, bhh_p)

    return jnp.transpose(out_t, (1, 0, 2))   # back to batch-first (B, T, H)


def rnn_forward(params, inputs, config):
    """Mirrors RNN.forward: outputs, _ = self.rnn(inputs); return outputs."""
    if config["rnn"] != "gru":
        # TODO(synk): LSTM branch of rnn2module not implemented (config selects 'gru').
        raise NotImplementedError("only the 'gru' branch is implemented")
    if config["bidirectional"]:
        # TODO(synk): bidirectional GRU (reverse pass + concat) not implemented.
        raise NotImplementedError("bidirectional GRU not implemented")
    return gru_forward(inputs, params["w_ih_l0"], params["b_ih_l0"],
                       params["w_hh_l0"], params["b_hh_l0"])


# ----------------------------- reference & init -------------------------------
def gru_reference(x, w_ih, b_ih, w_hh, b_hh):
    """Pure-JAX GRU matching torch.nn.GRU math, for a correctness check."""
    B, T, D = x.shape
    H = w_hh.shape[1]

    def step(h, xt):
        gi = xt @ w_ih.T + b_ih
        gh = h @ w_hh.T + b_hh
        r = jax.nn.sigmoid(gi[:, :H] + gh[:, :H])
        z = jax.nn.sigmoid(gi[:, H:2 * H] + gh[:, H:2 * H])
        n = jnp.tanh(gi[:, 2 * H:] + r * gh[:, 2 * H:])
        h_new = (1.0 - z) * n + z * h
        return h_new, h_new

    _, ys = lax.scan(step, jnp.zeros((B, H), jnp.float32),
                     jnp.transpose(x, (1, 0, 2)))
    return jnp.transpose(ys, (1, 0, 2))


def init_gru_params(key, input_dim, hidden_dim):
    """Matches torch.nn.GRU default init: U(-1/sqrt(H), 1/sqrt(H))."""
    k = 1.0 / jnp.sqrt(jnp.float32(hidden_dim))
    keys = jax.random.split(key, 4)

    def uni(kk, shape):
        return jax.random.uniform(kk, shape, minval=-k, maxval=k,
                                  dtype=jnp.float32)

    return {
        "w_ih_l0": uni(keys[0], (3 * hidden_dim, input_dim)),
        "w_hh_l0": uni(keys[1], (3 * hidden_dim, hidden_dim)),
        "b_ih_l0": uni(keys[2], (3 * hidden_dim,)),
        "b_hh_l0": uni(keys[3], (3 * hidden_dim,)),
    }


# ----------------------------- main -------------------------------------------
if __name__ == "__main__":
    key = jax.random.PRNGKey(0)
    k_params, k_x = jax.random.split(key)

    B, T = 2, 8
    D = CONFIG["input_dim"]
    H = CONFIG["hidden_dim"]

    params = init_gru_params(k_params, D, H)
    inputs = jax.random.normal(k_x, (B, T, D), dtype=jnp.float32)

    fwd = jax.jit(functools.partial(rnn_forward, config=CONFIG))
    out = jax.block_until_ready(fwd(params, inputs))

    assert out.shape == (B, T, H)
    assert bool(jnp.all(jnp.isfinite(out)))

    ref = gru_reference(inputs, params["w_ih_l0"], params["b_ih_l0"],
                        params["w_hh_l0"], params["b_hh_l0"])
    max_err = float(jnp.max(jnp.abs(out - ref)))
    assert max_err < 5e-2, f"kernel vs reference max abs err {max_err}"

    print("KERNEL_OK")
</pallas_src>

<mosaic_0001>
module attributes {stable_mosaic.version = 11 : i64} {
  func.func @_gru_seq_kernel(%arg0: i32, %arg1: memref<8x2x16xf32, #tpu.memory_space<vmem>>, %arg2: memref<16x128xf32, #tpu.memory_space<vmem>>, %arg3: memref<1x128xf32, #tpu.memory_space<vmem>>, %arg4: memref<32x128xf32, #tpu.memory_space<vmem>>, %arg5: memref<1x128xf32, #tpu.memory_space<vmem>>, %arg6: memref<8x2x32xf32, #tpu.memory_space<vmem>>) attributes {dimension_semantics = [#tpu.dimension_semantics<parallel>], iteration_bounds = array<i64: 1>, scalar_prefetch = 0 : i64, scratch_operands = 0 : i64, tpu.core_type = #tpu.core_type<tc>, window_params = [{transform_indices = @transform_0, window_bounds = array<i64: 8, 2, 16>}, {pipeline_mode = #tpu.pipeline_mode<synchronous>, transform_indices = @transform_1, window_bounds = array<i64: 16, 128>}, {pipeline_mode = #tpu.pipeline_mode<synchronous>, transform_indices = @transform_2, window_bounds = array<i64: 1, 128>}, {pipeline_mode = #tpu.pipeline_mode<synchronous>, transform_indices = @transform_3, window_bounds = array<i64: 32, 128>}, {pipeline_mode = #tpu.pipeline_mode<synchronous>, transform_indices = @transform_4, window_bounds = array<i64: 1, 128>}, {transform_indices = @transform_5, window_bounds = array<i64: 8, 2, 32>}]} {
    %c0 = arith.constant 0 : index
    %c0_0 = arith.constant 0 : index
    %0 = vector.load %arg2[%c0, %c0_0] : memref<16x128xf32, #tpu.memory_space<vmem>>, vector<16x128xf32>
    %c0_1 = arith.constant 0 : index
    %c0_2 = arith.constant 0 : index
    %1 = vector.load %arg3[%c0_1, %c0_2] : memref<1x128xf32, #tpu.memory_space<vmem>>, vector<1x128xf32>
    %c0_3 = arith.constant 0 : index
    %c0_4 = arith.constant 0 : index
    %2 = vector.load %arg4[%c0_3, %c0_4] : memref<32x128xf32, #tpu.memory_space<vmem>>, vector<32x128xf32>
    %c0_5 = arith.constant 0 : index
    %c0_6 = arith.constant 0 : index
    %3 = vector.load %arg5[%c0_5, %c0_6] : memref<1x128xf32, #tpu.memory_space<vmem>>, vector<1x128xf32>
    %cst = arith.constant 0.000000e+00 : f32
    %4 = vector.broadcast %cst : f32 to vector<2x32xf32>
    %c0_i32 = arith.constant 0 : i32
    %5 = arith.index_cast %c0_i32 : i32 to index
    %c0_7 = arith.constant 0 : index
    %c0_8 = arith.constant 0 : index
    %6 = vector.load %arg1[%5, %c0_7, %c0_8] : memref<8x2x16xf32, #tpu.memory_space<vmem>>, vector<1x2x16xf32>
    %7 = vector.shape_cast %6 : vector<1x2x16xf32> to vector<2x16xf32>
    %cst_9 = arith.constant dense<0.000000e+00> : vector<2x128xf32>
    %8 = tpu.matmul %7, %0, %cst_9 {dimension_numbers = #tpu.dot_dimension_numbers<[1], [0], [0], [1], [0, 0, 1, 1], [], []>} : vector<2x16xf32>, vector<16x128xf32>, vector<2x128xf32> -> vector<2x128xf32>
    %9 = vector.broadcast %1 : vector<1x128xf32> to vector<2x128xf32>
    %10 = arith.addf %8, %9 : vector<2x128xf32>
    %cst_10 = arith.constant dense<0.000000e+00> : vector<2x128xf32>
    %11 = tpu.matmul %4, %2, %cst_10 {dimension_numbers = #tpu.dot_dimension_numbers<[1], [0], [0], [1], [0, 0, 1, 1], [], []>} : vector<2x32xf32>, vector<32x128xf32>, vector<2x128xf32> -> vector<2x128xf32>
    %12 = vector.broadcast %3 : vector<1x128xf32> to vector<2x128xf32>
    %13 = arith.addf %11, %12 : vector<2x128xf32>
    %14 = vector.extract_strided_slice %10 {offsets = [0, 0], sizes = [2, 32], strides = [1, 1]} : vector<2x128xf32> to vector<2x32xf32>
    %15 = vector.extract_strided_slice %13 {offsets = [0, 0], sizes = [2, 32], strides = [1, 1]} : vector<2x128xf32> to vector<2x32xf32>
    %16 = arith.addf %14, %15 : vector<2x32xf32>
    %17 = arith.negf %16 : vector<2x32xf32>
    %18 = math.exp %17 : vector<2x32xf32>
    %cst_11 = arith.constant 1.000000e+00 : f32
    %19 = vector.broadcast %cst_11 : f32 to vector<2x32xf32>
    %20 = arith.addf %19, %18 : vector<2x32xf32>
    %21 = arith.divf %19, %20 : vector<2x32xf32>
    %22 = vector.extract_strided_slice %10 {offsets = [0, 32], sizes = [2, 32], strides = [1, 1]} : vector<2x128xf32> to vector<2x32xf32>
    %23 = vector.extract_strided_slice %13 {offsets = [0, 32], sizes = [2, 32], strides = [1, 1]} : vector<2x128xf32> to vector<2x32xf32>
    %24 = arith.addf %22, %23 : vector<2x32xf32>
    %25 = arith.negf %24 : vector<2x32xf32>
    %26 = math.exp %25 : vector<2x32xf32>
    %cst_12 = arith.constant 1.000000e+00 : f32
    %27 = vector.broadcast %cst_12 : f32 to vector<2x32xf32>
    %28 = arith.addf %27, %26 : vector<2x32xf32>
    %29 = arith.divf %27, %28 : vector<2x32xf32>
    %30 = vector.extract_strided_slice %10 {offsets = [0, 64], sizes = [2, 32], strides = [1, 1]} : vector<2x128xf32> to vector<2x32xf32>
    %31 = vector.extract_strided_slice %13 {offsets = [0, 64], sizes = [2, 32], strides = [1, 1]} : vector<2x128xf32> to vector<2x32xf32>
    %32 = arith.mulf %21, %31 : vector<2x32xf32>
    %33 = arith.addf %30, %32 : vector<2x32xf32>
    %34 = math.tanh %33 : vector<2x32xf32>
    %cst_13 = arith.constant 1.000000e+00 : f32
    %35 = vector.broadcast %cst_13 : f32 to vector<2x32xf32>
    %36 = arith.subf %35, %29 : vector<2x32xf32>
    %37 = arith.mulf %36, %34 : vector<2x32xf32>
    %38 = arith.mulf %29, %4 : vector<2x32xf32>
    %39 = arith.addf %37, %38 : vector<2x32xf32>
    %40 = arith.index_cast %c0_i32 : i32 to index
    %c0_14 = arith.constant 0 : index
    %c0_15 = arith.constant 0 : index
    %41 = vector.load %arg6[%40, %c0_14, %c0_15] : memref<8x2x32xf32, #tpu.memory_space<vmem>>, vector<1x2x32xf32>
    %42 = vector.shape_cast %41 : vector<1x2x32xf32> to vector<2x32xf32>
    %43 = vector.shape_cast %39 : vector<2x32xf32> to vector<1x2x32xf32>
    tpu.vector_store %arg6[%40, %c0_14, %c0_15], %43 {strides = array<i32>} : memref<8x2x32xf32, #tpu.memory_space<vmem>>, vector<1x2x32xf32>,
    %c1_i32 = arith.constant 1 : i32
    %44 = arith.index_cast %c1_i32 : i32 to index
    %c0_16 = arith.constant 0 : index
    %c0_17 = arith.constant 0 : index
    %45 = vector.load %arg1[%44, %c0_16, %c0_17] : memref<8x2x16xf32, #tpu.memory_space<vmem>>, vector<1x2x16xf32>
    %46 = vector.shape_cast %45 : vector<1x2x16xf32> to vector<2x16xf32>
    %cst_18 = arith.constant dense<0.000000e+00> : vector<2x128xf32>
    %47 = tpu.matmul %46, %0, %cst_18 {dimension_numbers = #tpu.dot_dimension_numbers<[1], [0], [0], [1], [0, 0, 1, 1], [], []>} : vector<2x16xf32>, vector<16x128xf32>, vector<2x128xf32> -> vector<2x128xf32>
    %48 = vector.broadcast %1 : vector<1x128xf32> to vector<2x128xf32>
    %49 = arith.addf %47, %48 : vector<2x128xf32>
    %cst_19 = arith.constant dense<0.000000e+00> : vector<2x128xf32>
    %50 = tpu.matmul %39, %2, %cst_19 {dimension_numbers = #tpu.dot_dimension_numbers<[1], [0], [0], [1], [0, 0, 1, 1], [], []>} : vector<2x32xf32>, vector<32x128xf32>, vector<2x128xf32> -> vector<2x128xf32>
    %51 = vector.broadcast %3 : vector<1x128xf32> to vector<2x128xf32>
    %52 = arith.addf %50, %51 : vector<2x128xf32>
    %53 = vector.extract_strided_slice %49 {offsets = [0, 0], sizes = [2, 32], strides = [1, 1]} : vector<2x128xf32> to vector<2x32xf32>
    %54 = vector.extract_strided_slice %52 {offsets = [0, 0], sizes = [2, 32], strides = [1, 1]} : vector<2x128xf32> to vector<2x32xf32>
    %55 = arith.addf %53, %54 : vector<2x32xf32>
    %56 = arith.negf %55 : vector<2x32xf32>
    %57 = math.exp %56 : vector<2x32xf32>
    %cst_20 = arith.constant 1.000000e+00 : f32
    %58 = vector.broadcast %cst_20 : f32 to vector<2x32xf32>
    %59 = arith.addf %58, %57 : vector<2x32xf32>
    %60 = arith.divf %58, %59 : vector<2x32xf32>
    %61 = vector.extract_strided_slice %49 {offsets = [0, 32], sizes = [2, 32], strides = [1, 1]} : vector<2x128xf32> to vector<2x32xf32>
    %62 = vector.extract_strided_slice %52 {offsets = [0, 32], sizes = [2, 32], strides = [1, 1]} : vector<2x128xf32> to vector<2x32xf32>
    %63 = arith.addf %61, %62 : vector<2x32xf32>
    %64 = arith.negf %63 : vector<2x32xf32>
    %65 = math.exp %64 : vector<2x32xf32>
    %cst_21 = arith.constant 1.000000e+00 : f32
    %66 = vector.broadcast %cst_21 : f32 to vector<2x32xf32>
    %67 = arith.addf %66, %65 : vector<2x32xf32>
    %68 = arith.divf %66, %67 : vector<2x32xf32>
    %69 = vector.extract_strided_slice %49 {offsets = [0, 64], sizes = [2, 32], strides = [1, 1]} : vector<2x128xf32> to vector<2x32xf32>
    %70 = vector.extract_strided_slice %52 {offsets = [0, 64], sizes = [2, 32], strides = [1, 1]} : vector<2x128xf32> to vector<2x32xf32>
    %71 = arith.mulf %60, %70 : vector<2x32xf32>
    %72 = arith.addf %69, %71 : vector<2x32xf32>
    %73 = math.tanh %72 : vector<2x32xf32>
    %cst_22 = arith.constant 1.000000e+00 : f32
    %74 = vector.broadcast %cst_22 : f32 to vector<2x32xf32>
    %75 = arith.subf %74, %68 : vector<2x32xf32>
    %76 = arith.mulf %75, %73 : vector<2x32xf32>
    %77 = arith.mulf %68, %39 : vector<2x32xf32>
    %78 = arith.addf %76, %77 : vector<2x32xf32>
    %79 = arith.index_cast %c1_i32 : i32 to index
    %c0_23 = arith.constant 0 : index
    %c0_24 = arith.constant 0 : index
    %80 = vector.load %arg6[%79, %c0_23, %c0_24] : memref<8x2x32xf32, #tpu.memory_space<vmem>>, vector<1x2x32xf32>
    %81 = vector.shape_cast %80 : vector<1x2x32xf32> to vector<2x32xf32>
    %82 = vector.shape_cast %78 : vector<2x32xf32> to vector<1x2x32xf32>
    tpu.vector_store %arg6[%79, %c0_23, %c0_24], %82 {strides = array<i32>} : memref<8x2x32xf32, #tpu.memory_space<vmem>>, vector<1x2x32xf32>,
    %c2_i32 = arith.constant 2 : i32
    %83 = arith.index_cast %c2_i32 : i32 to index
    %c0_25 = arith.constant 0 : index
    %c0_26 = arith.constant 0 : index
    %84 = vector.load %arg1[%83, %c0_25, %c0_26] : memref<8x2x16xf32, #tpu.memory_space<vmem>>, vector<1x2x16xf32>
    %85 = vector.shape_cast %84 : vector<1x2x16xf32> to vector<2x16xf32>
    %cst_27 = arith.constant dense<0.000000e+00> : vector<2x128xf32>
    %86 = tpu.matmul %85, %0, %cst_27 {dimension_numbers = #tpu.dot_dimension_numbers<[1], [0], [0], [1], [0, 0, 1, 1], [], []>} : vector<2x16xf32>, vector<16x128xf32>, vector<2x128xf32> -> vector<2x128xf32>
    %87 = vector.broadcast %1 : vector<1x128xf32> to vector<2x128xf32>
    %88 = arith.addf %86, %87 : vector<2x128xf32>
    %cst_28 = arith.constant dense<0.000000e+00> : vector<2x128xf32>
    %89 = tpu.matmul %78, %2, %cst_28 {dimension_numbers = #tpu.dot_dimension_numbers<[1], [0], [0], [1], [0, 0, 1, 1], [], []>} : vector<2x32xf32>, vector<32x128xf32>, vector<2x128xf32> -> vector<2x128xf32>
    %90 = vector.broadcast %3 : vector<1x128xf32> to vector<2x128xf32>
    %91 = arith.addf %89, %90 : vector<2x128xf32>
    %92 = vector.extract_strided_slice %88 {offsets = [0, 0], sizes = [2, 32], strides = [1, 1]} : vector<2x128xf32> to vector<2x32xf32>
    %93 = vector.extract_strided_slice %91 {offsets = [0, 0], sizes = [2, 32], strides = [1, 1]} : vector<2x128xf32> to vector<2x32xf32>
    %94 = arith.addf %92, %93 : vector<2x32xf32>
    %95 = arith.negf %94 : vector<2x32xf32>
    %96 = math.exp %95 : vector<2x32xf32>
    %cst_29 = arith.constant 1.000000e+00 : f32
    %97 = vector.broadcast %cst_29 : f32 to vector<2x32xf32>
    %98 = arith.addf %97, %96 : vector<2x32xf32>
    %99 = arith.divf %97, %98 : vector<2x32xf32>
    %100 = vector.extract_strided_slice %88 {offsets = [0, 32], sizes = [2, 32], strides = [1, 1]} : vector<2x128xf32> to vector<2x32xf32>
    %101 = vector.extract_strided_slice %91 {offsets = [0, 32], sizes = [2, 32], strides = [1, 1]} : vector<2x128xf32> to vector<2x32xf32>
    %102 = arith.addf %100, %101 : vector<2x32xf32>
    %103 = arith.negf %102 : vector<2x32xf32>
    %104 = math.exp %103 : vector<2x32xf32>
    %cst_30 = arith.constant 1.000000e+00 : f32
    %105 = vector.broadcast %cst_30 : f32 to vector<2x32xf32>
    %106 = arith.addf %105, %104 : vector<2x32xf32>
    %107 = arith.divf %105, %106 : vector<2x32xf32>
    %108 = vector.extract_strided_slice %88 {offsets = [0, 64], sizes = [2, 32], strides = [1, 1]} : vector<2x128xf32> to vector<2x32xf32>
    %109 = vector.extract_strided_slice %91 {offsets = [0, 64], sizes = [2, 32], strides = [1, 1]} : vector<2x128xf32> to vector<2x32xf32>
    %110 = arith.mulf %99, %109 : vector<2x32xf32>
    %111 = arith.addf %108, %110 : vector<2x32xf32>
    %112 = math.tanh %111 : vector<2x32xf32>
    %cst_31 = arith.constant 1.000000e+00 : f32
    %113 = vector.broadcast %cst_31 : f32 to vector<2x32xf32>
    %114 = arith.subf %113, %107 : vector<2x32xf32>
    %115 = arith.mulf %114, %112 : vector<2x32xf32>
    %116 = arith.mulf %107, %78 : vector<2x32xf32>
    %117 = arith.addf %115, %116 : vector<2x32xf32>
    %118 = arith.index_cast %c2_i32 : i32 to index
    %c0_32 = arith.constant 0 : index
    %c0_33 = arith.constant 0 : index
    %119 = vector.load %arg6[%118, %c0_32, %c0_33] : memref<8x2x32xf32, #tpu.memory_space<vmem>>, vector<1x2x32xf32>
    %120 = vector.shape_cast %119 : vector<1x2x32xf32> to vector<2x32xf32>
    %121 = vector.shape_cast %117 : vector<2x32xf32> to vector<1x2x32xf32>
    tpu.vector_store %arg6[%118, %c0_32, %c0_33], %121 {strides = array<i32>} : memref<8x2x32xf32, #tpu.memory_space<vmem>>, vector<1x2x32xf32>,
    %c3_i32 = arith.constant 3 : i32
    %122 = arith.index_cast %c3_i32 : i32 to index
    %c0_34 = arith.constant 0 : index
    %c0_35 = arith.constant 0 : index
    %123 = vector.load %arg1[%122, %c0_34, %c0_35] : memref<8x2x16xf32, #tpu.memory_space<vmem>>, vector<1x2x16xf32>
    %124 = vector.shape_cast %123 : vector<1x2x16xf32> to vector<2x16xf32>
    %cst_36 = arith.constant dense<0.000000e+00> : vector<2x128xf32>
    %125 = tpu.matmul %124, %0, %cst_36 {dimension_numbers = #tpu.dot_dimension_numbers<[1], [0], [0], [1], [0, 0, 1, 1], [], []>} : vector<2x16xf32>, vector<16x128xf32>, vector<2x128xf32> -> vector<2x128xf32>
    %126 = vector.broadcast %1 : vector<1x128xf32> to vector<2x128xf32>
    %127 = arith.addf %125, %126 : vector<2x128xf32>
    %cst_37 = arith.constant dense<0.000000e+00> : vector<2x128xf32>
    %128 = tpu.matmul %117, %2, %cst_37 {dimension_numbers = #tpu.dot_dimension_numbers<[1], [0], [0], [1], [0, 0, 1, 1], [], []>} : vector<2x32xf32>, vector<32x128xf32>, vector<2x128xf32> -> vector<2x128xf32>
    %129 = vector.broadcast %3 : vector<1x128xf32> to vector<2x128xf32>
    %130 = arith.addf %128, %129 : vector<2x128xf32>
    %131 = vector.extract_strided_slice %127 {offsets = [0, 0], sizes = [2, 32], strides = [1, 1]} : vector<2x128xf32> to vector<2x32xf32>
    %132 = vector.extract_strided_slice %130 {offsets = [0, 0], sizes = [2, 32], strides = [1, 1]} : vector<2x128xf32> to vector<2x32xf32>
    %133 = arith.addf %131, %132 : vector<2x32xf32>
    %134 = arith.negf %133 : vector<2x32xf32>
    %135 = math.exp %134 : vector<2x32xf32>
    %cst_38 = arith.constant 1.000000e+00 : f32
    %136 = vector.broadcast %cst_38 : f32 to vector<2x32xf32>
    %137 = arith.addf %136, %135 : vector<2x32xf32>
    %138 = arith.divf %136, %137 : vector<2x32xf32>
    %139 = vector.extract_strided_slice %127 {offsets = [0, 32], sizes = [2, 32], strides = [1, 1]} : vector<2x128xf32> to vector<2x32xf32>
    %140 = vector.extract_strided_slice %130 {offsets = [0, 32], sizes = [2, 32], strides = [1, 1]} : vector<2x128xf32> to vector<2x32xf32>
    %141 = arith.addf %139, %140 : vector<2x32xf32>
    %142 = arith.negf %141 : vector<2x32xf32>
    %143 = math.exp %142 : vector<2x32xf32>
    %cst_39 = arith.constant 1.000000e+00 : f32
    %144 = vector.broadcast %cst_39 : f32 to vector<2x32xf32>
    %145 = arith.addf %144, %143 : vector<2x32xf32>
    %146 = arith.divf %144, %145 : vector<2x32xf32>
    %147 = vector.extract_strided_slice %127 {offsets = [0, 64], sizes = [2, 32], strides = [1, 1]} : vector<2x128xf32> to vector<2x32xf32>
    %148 = vector.extract_strided_slice %130 {offsets = [0, 64], sizes = [2, 32], strides = [1, 1]} : vector<2x128xf32> to vector<2x32xf32>
    %149 = arith.mulf %138, %148 : vector<2x32xf32>
    %150 = arith.addf %147, %149 : vector<2x32xf32>
    %151 = math.tanh %150 : vector<2x32xf32>
    %cst_40 = arith.constant 1.000000e+00 : f32
    %152 = vector.broadcast %cst_40 : f32 to vector<2x32xf32>
    %153 = arith.subf %152, %146 : vector<2x32xf32>
    %154 = arith.mulf %153, %151 : vector<2x32xf32>
    %155 = arith.mulf %146, %117 : vector<2x32xf32>
    %156 = arith.addf %154, %155 : vector<2x32xf32>
    %157 = arith.index_cast %c3_i32 : i32 to index
    %c0_41 = arith.constant 0 : index
    %c0_42 = arith.constant 0 : index
    %158 = vector.load %arg6[%157, %c0_41, %c0_42] : memref<8x2x32xf32, #tpu.memory_space<vmem>>, vector<1x2x32xf32>
    %159 = vector.shape_cast %158 : vector<1x2x32xf32> to vector<2x32xf32>
    %160 = vector.shape_cast %156 : vector<2x32xf32> to vector<1x2x32xf32>
    tpu.vector_store %arg6[%157, %c0_41, %c0_42], %160 {strides = array<i32>} : memref<8x2x32xf32, #tpu.memory_space<vmem>>, vector<1x2x32xf32>,
    %c4_i32 = arith.constant 4 : i32
    %161 = arith.index_cast %c4_i32 : i32 to index
    %c0_43 = arith.constant 0 : index
    %c0_44 = arith.constant 0 : index
    %162 = vector.load %arg1[%161, %c0_43, %c0_44] : memref<8x2x16xf32, #tpu.memory_space<vmem>>, vector<1x2x16xf32>
    %163 = vector.shape_cast %162 : vector<1x2x16xf32> to vector<2x16xf32>
    %cst_45 = arith.constant dense<0.000000e+00> : vector<2x128xf32>
    %164 = tpu.matmul %163, %0, %cst_45 {dimension_numbers = #tpu.dot_dimension_numbers<[1], [0], [0], [1], [0, 0, 1, 1], [], []>} : vector<2x16xf32>, vector<16x128xf32>, vector<2x128xf32> -> vector<2x128xf32>
    %165 = vector.broadcast %1 : vector<1x128xf32> to vector<2x128xf32>
    %166 = arith.addf %164, %165 : vector<2x128xf32>
    %cst_46 = arith.constant dense<0.000000e+00> : vector<2x128xf32>
    %167 = tpu.matmul %156, %2, %cst_46 {dimension_numbers = #tpu.dot_dimension_numbers<[1], [0], [0], [1], [0, 0, 1, 1], [], []>} : vector<2x32xf32>, vector<32x128xf32>, vector<2x128xf32> -> vector<2x128xf32>
    %168 = vector.broadcast %3 : vector<1x128xf32> to vector<2x128xf32>
    %169 = arith.addf %167, %168 : vector<2x128xf32>
    %170 = vector.extract_strided_slice %166 {offsets = [0, 0], sizes = [2, 32], strides = [1, 1]} : vector<2x128xf32> to vector<2x32xf32>
    %171 = vector.extract_strided_slice %169 {offsets = [0, 0], sizes = [2, 32], strides = [1, 1]} : vector<2x128xf32> to vector<2x32xf32>
    %172 = arith.addf %170, %171 : vector<2x32xf32>
    %173 = arith.negf %172 : vector<2x32xf32>
    %174 = math.exp %173 : vector<2x32xf32>
    %cst_47 = arith.constant 1.000000e+00 : f32
    %175 = vector.broadcast %cst_47 : f32 to vector<2x32xf32>
    %176 = arith.addf %175, %174 : vector<2x32xf32>
    %177 = arith.divf %175, %176 : vector<2x32xf32>
    %178 = vector.extract_strided_slice %166 {offsets = [0, 32], sizes = [2, 32], strides = [1, 1]} : vector<2x128xf32> to vector<2x32xf32>
    %179 = vector.extract_strided_slice %169 {offsets = [0, 32], sizes = [2, 32], strides = [1, 1]} : vector<2x128xf32> to vector<2x32xf32>
    %180 = arith.addf %178, %179 : vector<2x32xf32>
    %181 = arith.negf %180 : vector<2x32xf32>
    %182 = math.exp %181 : vector<2x32xf32>
    %cst_48 = arith.constant 1.000000e+00 : f32
    %183 = vector.broadcast %cst_48 : f32 to vector<2x32xf32>
    %184 = arith.addf %183, %182 : vector<2x32xf32>
    %185 = arith.divf %183, %184 : vector<2x32xf32>
    %186 = vector.extract_strided_slice %166 {offsets = [0, 64], sizes = [2, 32], strides = [1, 1]} : vector<2x128xf32> to vector<2x32xf32>
    %187 = vector.extract_strided_slice %169 {offsets = [0, 64], sizes = [2, 32], strides = [1, 1]} : vector<2x128xf32> to vector<2x32xf32>
    %188 = arith.mulf %177, %187 : vector<2x32xf32>
    %189 = arith.addf %186, %188 : vector<2x32xf32>
    %190 = math.tanh %189 : vector<2x32xf32>
    %cst_49 = arith.constant 1.000000e+00 : f32
    %191 = vector.broadcast %cst_49 : f32 to vector<2x32xf32>
    %192 = arith.subf %191, %185 : vector<2x32xf32>
    %193 = arith.mulf %192, %190 : vector<2x32xf32>
    %194 = arith.mulf %185, %156 : vector<2x32xf32>
    %195 = arith.addf %193, %194 : vector<2x32xf32>
    %196 = arith.index_cast %c4_i32 : i32 to index
    %c0_50 = arith.constant 0 : index
    %c0_51 = arith.constant 0 : index
    %197 = vector.load %arg6[%196, %c0_50, %c0_51] : memref<8x2x32xf32, #tpu.memory_space<vmem>>, vector<1x2x32xf32>
    %198 = vector.shape_cast %197 : vector<1x2x32xf32> to vector<2x32xf32>
    %199 = vector.shape_cast %195 : vector<2x32xf32> to vector<1x2x32xf32>
    tpu.vector_store %arg6[%196, %c0_50, %c0_51], %199 {strides = array<i32>} : memref<8x2x32xf32, #tpu.memory_space<vmem>>, vector<1x2x32xf32>,
    %c5_i32 = arith.constant 5 : i32
    %200 = arith.index_cast %c5_i32 : i32 to index
    %c0_52 = arith.constant 0 : index
    %c0_53 = arith.constant 0 : index
    %201 = vector.load %arg1[%200, %c0_52, %c0_53] : memref<8x2x16xf32, #tpu.memory_space<vmem>>, vector<1x2x16xf32>
    %202 = vector.shape_cast %201 : vector<1x2x16xf32> to vector<2x16xf32>
    %cst_54 = arith.constant dense<0.000000e+00> : vector<2x128xf32>
    %203 = tpu.matmul %202, %0, %cst_54 {dimension_numbers = #tpu.dot_dimension_numbers<[1], [0], [0], [1], [0, 0, 1, 1], [], []>} : vector<2x16xf32>, vector<16x128xf32>, vector<2x128xf32> -> vector<2x128xf32>
    %204 = vector.broadcast %1 : vector<1x128xf32> to vector<2x128xf32>
    %205 = arith.addf %203, %204 : vector<2x128xf32>
    %cst_55 = arith.constant dense<0.000000e+00> : vector<2x128xf32>
    %206 = tpu.matmul %195, %2, %cst_55 {dimension_numbers = #tpu.dot_dimension_numbers<[1], [0], [0], [1], [0, 0, 1, 1], [], []>} : vector<2x32xf32>, vector<32x128xf32>, vector<2x128xf32> -> vector<2x128xf32>
    %207 = vector.broadcast %3 : vector<1x128xf32> to vector<2x128xf32>
    %208 = arith.addf %206, %207 : vector<2x128xf32>
    %209 = vector.extract_strided_slice %205 {offsets = [0, 0], sizes = [2, 32], strides = [1, 1]} : vector<2x128xf32> to vector<2x32xf32>
    %210 = vector.extract_strided_slice %208 {offsets = [0, 0], sizes = [2, 32], strides = [1, 1]} : vector<2x128xf32> to vector<2x32xf32>
    %211 = arith.addf %209, %210 : vector<2x32xf32>
    %212 = arith.negf %211 : vector<2x32xf32>
    %213 = math.exp %212 : vector<2x32xf32>
    %cst_56 = arith.constant 1.000000e+00 : f32
    %214 = vector.broadcast %cst_56 : f32 to vector<2x32xf32>
    %215 = arith.addf %214, %213 : vector<2x32xf32>
    %216 = arith.divf %214, %215 : vector<2x32xf32>
    %217 = vector.extract_strided_slice %205 {offsets = [0, 32], sizes = [2, 32], strides = [1, 1]} : vector<2x128xf32> to vector<2x32xf32>
    %218 = vector.extract_strided_slice %208 {offsets = [0, 32], sizes = [2, 32], strides = [1, 1]} : vector<2x128xf32> to vector<2x32xf32>
    %219 = arith.addf %217, %218 : vector<2x32xf32>
    %220 = arith.negf %219 : vector<2x32xf32>
    %221 = math.exp %220 : vector<2x32xf32>
    %cst_57 = arith.constant 1.000000e+00 : f32
    %222 = vector.broadcast %cst_57 : f32 to vector<2x32xf32>
    %223 = arith.addf %222, %221 : vector<2x32xf32>
    %224 = arith.divf %222, %223 : vector<2x32xf32>
    %225 = vector.extract_strided_slice %205 {offsets = [0, 64], sizes = [2, 32], strides = [1, 1]} : vector<2x128xf32> to vector<2x32xf32>
    %226 = vector.extract_strided_slice %208 {offsets = [0, 64], sizes = [2, 32], strides = [1, 1]} : vector<2x128xf32> to vector<2x32xf32>
    %227 = arith.mulf %216, %226 : vector<2x32xf32>
    %228 = arith.addf %225, %227 : vector<2x32xf32>
    %229 = math.tanh %228 : vector<2x32xf32>
    %cst_58 = arith.constant 1.000000e+00 : f32
    %230 = vector.broadcast %cst_58 : f32 to vector<2x32xf32>
    %231 = arith.subf %230, %224 : vector<2x32xf32>
    %232 = arith.mulf %231, %229 : vector<2x32xf32>
    %233 = arith.mulf %224, %195 : vector<2x32xf32>
    %234 = arith.addf %232, %233 : vector<2x32xf32>
    %235 = arith.index_cast %c5_i32 : i32 to index
    %c0_59 = arith.constant 0 : index
    %c0_60 = arith.constant 0 : index
    %236 = vector.load %arg6[%235, %c0_59, %c0_60] : memref<8x2x32xf32, #tpu.memory_space<vmem>>, vector<1x2x32xf32>
    %237 = vector.shape_cast %236 : vector<1x2x32xf32> to vector<2x32xf32>
    %238 = vector.shape_cast %234 : vector<2x32xf32> to vector<1x2x32xf32>
    tpu.vector_store %arg6[%235, %c0_59, %c0_60], %238 {strides = array<i32>} : memref<8x2x32xf32, #tpu.memory_space<vmem>>, vector<1x2x32xf32>,
    %c6_i32 = arith.constant 6 : i32
    %239 = arith.index_cast %c6_i32 : i32 to index
    %c0_61 = arith.constant 0 : index
    %c0_62 = arith.constant 0 : index
    %240 = vector.load %arg1[%239, %c0_61, %c0_62] : memref<8x2x16xf32, #tpu.memory_space<vmem>>, vector<1x2x16xf32>
    %241 = vector.shape_cast %240 : vector<1x2x16xf32> to vector<2x16xf32>
    %cst_63 = arith.constant dense<0.000000e+00> : vector<2x128xf32>
    %242 = tpu.matmul %241, %0, %cst_63 {dimension_numbers = #tpu.dot_dimension_numbers<[1], [0], [0], [1], [0, 0, 1, 1], [], []>} : vector<2x16xf32>, vector<16x128xf32>, vector<2x128xf32> -> vector<2x128xf32>
    %243 = vector.broadcast %1 : vector<1x128xf32> to vector<2x128xf32>
    %244 = arith.addf %242, %243 : vector<2x128xf32>
    %cst_64 = arith.constant dense<0.000000e+00> : vector<2x128xf32>
    %245 = tpu.matmul %234, %2, %cst_64 {dimension_numbers = #tpu.dot_dimension_numbers<[1], [0], [0], [1], [0, 0, 1, 1], [], []>} : vector<2x32xf32>, vector<32x128xf32>, vector<2x128xf32> -> vector<2x128xf32>
    %246 = vector.broadcast %3 : vector<1x128xf32> to vector<2x128xf32>
    %247 = arith.addf %245, %246 : vector<2x128xf32>
    %248 = vector.extract_strided_slice %244 {offsets = [0, 0], sizes = [2, 32], strides = [1, 1]} : vector<2x128xf32> to vector<2x32xf32>
    %249 = vector.extract_strided_slice %247 {offsets = [0, 0], sizes = [2, 32], strides = [1, 1]} : vector<2x128xf32> to vector<2x32xf32>
    %250 = arith.addf %248, %249 : vector<2x32xf32>
    %251 = arith.negf %250 : vector<2x32xf32>
    %252 = math.exp %251 : vector<2x32xf32>
    %cst_65 = arith.constant 1.000000e+00 : f32
    %253 = vector.broadcast %cst_65 : f32 to vector<2x32xf32>
    %254 = arith.addf %253, %252 : vector<2x32xf32>
    %255 = arith.divf %253, %254 : vector<2x32xf32>
    %256 = vector.extract_strided_slice %244 {offsets = [0, 32], sizes = [2, 32], strides = [1, 1]} : vector<2x128xf32> to vector<2x32xf32>
    %257 = vector.extract_strided_slice %247 {offsets = [0, 32], sizes = [2, 32], strides = [1, 1]} : vector<2x128xf32> to vector<2x32xf32>
    %258 = arith.addf %256, %257 : vector<2x32xf32>
    %259 = arith.negf %258 : vector<2x32xf32>
    %260 = math.exp %259 : vector<2x32xf32>
    %cst_66 = arith.constant 1.000000e+00 : f32
    %261 = vector.broadcast %cst_66 : f32 to vector<2x32xf32>
    %262 = arith.addf %261, %260 : vector<2x32xf32>
    %263 = arith.divf %261, %262 : vector<2x32xf32>
    %264 = vector.extract_strided_slice %244 {offsets = [0, 64], sizes = [2, 32], strides = [1, 1]} : vector<2x128xf32> to vector<2x32xf32>
    %265 = vector.extract_strided_slice %247 {offsets = [0, 64], sizes = [2, 32], strides = [1, 1]} : vector<2x128xf32> to vector<2x32xf32>
    %266 = arith.mulf %255, %265 : vector<2x32xf32>
    %267 = arith.addf %264, %266 : vector<2x32xf32>
    %268 = math.tanh %267 : vector<2x32xf32>
    %cst_67 = arith.constant 1.000000e+00 : f32
    %269 = vector.broadcast %cst_67 : f32 to vector<2x32xf32>
    %270 = arith.subf %269, %263 : vector<2x32xf32>
    %271 = arith.mulf %270, %268 : vector<2x32xf32>
    %272 = arith.mulf %263, %234 : vector<2x32xf32>
    %273 = arith.addf %271, %272 : vector<2x32xf32>
    %274 = arith.index_cast %c6_i32 : i32 to index
    %c0_68 = arith.constant 0 : index
    %c0_69 = arith.constant 0 : index
    %275 = vector.load %arg6[%274, %c0_68, %c0_69] : memref<8x2x32xf32, #tpu.memory_space<vmem>>, vector<1x2x32xf32>
    %276 = vector.shape_cast %275 : vector<1x2x32xf32> to vector<2x32xf32>
    %277 = vector.shape_cast %273 : vector<2x32xf32> to vector<1x2x32xf32>
    tpu.vector_store %arg6[%274, %c0_68, %c0_69], %277 {strides = array<i32>} : memref<8x2x32xf32, #tpu.memory_space<vmem>>, vector<1x2x32xf32>,
    %c7_i32 = arith.constant 7 : i32
    %278 = arith.index_cast %c7_i32 : i32 to index
    %c0_70 = arith.constant 0 : index
    %c0_71 = arith.constant 0 : index
    %279 = vector.load %arg1[%278, %c0_70, %c0_71] : memref<8x2x16xf32, #tpu.memory_space<vmem>>, vector<1x2x16xf32>
    %280 = vector.shape_cast %279 : vector<1x2x16xf32> to vector<2x16xf32>
    %cst_72 = arith.constant dense<0.000000e+00> : vector<2x128xf32>
    %281 = tpu.matmul %280, %0, %cst_72 {dimension_numbers = #tpu.dot_dimension_numbers<[1], [0], [0], [1], [0, 0, 1, 1], [], []>} : vector<2x16xf32>, vector<16x128xf32>, vector<2x128xf32> -> vector<2x128xf32>
    %282 = vector.broadcast %1 : vector<1x128xf32> to vector<2x128xf32>
    %283 = arith.addf %281, %282 : vector<2x128xf32>
    %cst_73 = arith.constant dense<0.000000e+00> : vector<2x128xf32>
    %284 = tpu.matmul %273, %2, %cst_73 {dimension_numbers = #tpu.dot_dimension_numbers<[1], [0], [0], [1], [0, 0, 1, 1], [], []>} : vector<2x32xf32>, vector<32x128xf32>, vector<2x128xf32> -> vector<2x128xf32>
    %285 = vector.broadcast %3 : vector<1x128xf32> to vector<2x128xf32>
    %286 = arith.addf %284, %285 : vector<2x128xf32>
    %287 = vector.extract_strided_slice %283 {offsets = [0, 0], sizes = [2, 32], strides = [1, 1]} : vector<2x128xf32> to vector<2x32xf32>
    %288 = vector.extract_strided_slice %286 {offsets = [0, 0], sizes = [2, 32], strides = [1, 1]} : vector<2x128xf32> to vector<2x32xf32>
    %289 = arith.addf %287, %288 : vector<2x32xf32>
    %290 = arith.negf %289 : vector<2x32xf32>
    %291 = math.exp %290 : vector<2x32xf32>
    %cst_74 = arith.constant 1.000000e+00 : f32
    %292 = vector.broadcast %cst_74 : f32 to vector<2x32xf32>
    %293 = arith.addf %292, %291 : vector<2x32xf32>
    %294 = arith.divf %292, %293 : vector<2x32xf32>
    %295 = vector.extract_strided_slice %283 {offsets = [0, 32], sizes = [2, 32], strides = [1, 1]} : vector<2x128xf32> to vector<2x32xf32>
    %296 = vector.extract_strided_slice %286 {offsets = [0, 32], sizes = [2, 32], strides = [1, 1]} : vector<2x128xf32> to vector<2x32xf32>
    %297 = arith.addf %295, %296 : vector<2x32xf32>
    %298 = arith.negf %297 : vector<2x32xf32>
    %299 = math.exp %298 : vector<2x32xf32>
    %cst_75 = arith.constant 1.000000e+00 : f32
    %300 = vector.broadcast %cst_75 : f32 to vector<2x32xf32>
    %301 = arith.addf %300, %299 : vector<2x32xf32>
    %302 = arith.divf %300, %301 : vector<2x32xf32>
    %303 = vector.extract_strided_slice %283 {offsets = [0, 64], sizes = [2, 32], strides = [1, 1]} : vector<2x128xf32> to vector<2x32xf32>
    %304 = vector.extract_strided_slice %286 {offsets = [0, 64], sizes = [2, 32], strides = [1, 1]} : vector<2x128xf32> to vector<2x32xf32>
    %305 = arith.mulf %294, %304 : vector<2x32xf32>
    %306 = arith.addf %303, %305 : vector<2x32xf32>
    %307 = math.tanh %306 : vector<2x32xf32>
    %cst_76 = arith.constant 1.000000e+00 : f32
    %308 = vector.broadcast %cst_76 : f32 to vector<2x32xf32>
    %309 = arith.subf %308, %302 : vector<2x32xf32>
    %310 = arith.mulf %309, %307 : vector<2x32xf32>
    %311 = arith.mulf %302, %273 : vector<2x32xf32>
    %312 = arith.addf %310, %311 : vector<2x32xf32>
    %313 = arith.index_cast %c7_i32 : i32 to index
    %c0_77 = arith.constant 0 : index
    %c0_78 = arith.constant 0 : index
    %314 = vector.load %arg6[%313, %c0_77, %c0_78] : memref<8x2x32xf32, #tpu.memory_space<vmem>>, vector<1x2x32xf32>
    %315 = vector.shape_cast %314 : vector<1x2x32xf32> to vector<2x32xf32>
    %316 = vector.shape_cast %312 : vector<2x32xf32> to vector<1x2x32xf32>
    tpu.vector_store %arg6[%313, %c0_77, %c0_78], %316 {strides = array<i32>} : memref<8x2x32xf32, #tpu.memory_space<vmem>>, vector<1x2x32xf32>,
    %c8_i32 = arith.constant 8 : i32
    return
  }
  func.func @transform_0(%arg0: i32) -> (i32, i32, i32) {
    %c0_i32 = arith.constant 0 : i32
    %c0_i32_0 = arith.constant 0 : i32
    %c0_i32_1 = arith.constant 0 : i32
    return %c0_i32, %arg0, %c0_i32_0 : i32, i32, i32
  }
  func.func @transform_1(%arg0: i32) -> (i32, i32) {
    %c0_i32 = arith.constant 0 : i32
    %c0_i32_0 = arith.constant 0 : i32
    %c0_i32_1 = arith.constant 0 : i32
    return %c0_i32, %c0_i32_0 : i32, i32
  }
  func.func @transform_2(%arg0: i32) -> (i32, i32) {
    %c0_i32 = arith.constant 0 : i32
    %c0_i32_0 = arith.constant 0 : i32
    %c0_i32_1 = arith.constant 0 : i32
    return %c0_i32, %c0_i32_0 : i32, i32
  }
  func.func @transform_3(%arg0: i32) -> (i32, i32) {
    %c0_i32 = arith.constant 0 : i32
    %c0_i32_0 = arith.constant 0 : i32
    %c0_i32_1 = arith.constant 0 : i32
    return %c0_i32, %c0_i32_0 : i32, i32
  }
  func.func @transform_4(%arg0: i32) -> (i32, i32) {
    %c0_i32 = arith.constant 0 : i32
    %c0_i32_0 = arith.constant 0 : i32
    %c0_i32_1 = arith.constant 0 : i32
    return %c0_i32, %c0_i32_0 : i32, i32
  }
  func.func @transform_5(%arg0: i32) -> (i32, i32, i32) {
    %c0_i32 = arith.constant 0 : i32
    %c0_i32_0 = arith.constant 0 : i32
    %c0_i32_1 = arith.constant 0 : i32
    return %c0_i32, %arg0, %c0_i32_0 : i32, i32, i32
  }
}

</mosaic_0001>

<llo_original>
// kernel: rnn_forward.1
$region0: #{rnn_forward.1}
  #allocation0 [shape = 'u32[]', space=smem, size = 0x4, offset = 0x4, fixed_abs, tag = 'smem constant byte address 0x4 - core index']
  #allocation1 [shape = 'u32[144,128]{1,0:T(1,128)}', space=vmem, size = 0x12000, scoped, tag = 'internal scratch']
  %s0 = inlined_call_operand.vmem [shape: f32[8,2,16], index: 0, kind: input, shape index: {}]
  %s1 = inlined_call_operand.vmem [shape: f32[16,128], index: 1, kind: input, shape index: {}]
  %s2 = inlined_call_operand.vmem [shape: f32[1,128], index: 2, kind: input, shape index: {}]
  %s3 = inlined_call_operand.vmem [shape: f32[32,128], index: 3, kind: input, shape index: {}]
  %s4 = inlined_call_operand.vmem [shape: f32[1,128], index: 4, kind: input, shape index: {}]
  %s5 = inlined_call_operand.vmem [shape: f32[8,2,32], index: 5, kind: output, shape index: {}]
  %s6 = sld [smem:[#allocation0]]
  $region30: #{rnn_forward.1} parent=0
    _
  %s8 = ssub.s32 1, %s6
  %s9 = scalar_select 0, %s8, %s6
  // Predicated region
  $region2: #{rnn_forward.1} parent=0 // pred_check
    _
  $region3: #{rnn_forward.1} parent=0 // pred_check_branch
    %11 = sbr.rel (0) target = $region5
  $region4: #{rnn_forward.1} parent=0 // pred_region
    _
  $region5: #{rnn_forward.1} parent=0 // pred_fallthru
    _
  // Predicated region
  $region6: #{rnn_forward.1} parent=0 // pred_check
    _
  $region7: #{rnn_forward.1} parent=0 // pred_check_branch
    %13 = sbr.rel (0) target = $region9
  $region8: #{rnn_forward.1} parent=0 // pred_region
    _
  $region9: #{rnn_forward.1} parent=0 // pred_fallthru
    _
  // Predicated region
  $region10: #{rnn_forward.1} parent=0 // pred_check
    _
  $region11: #{rnn_forward.1} parent=0 // pred_check_branch
    %15 = sbr.rel (0) target = $region13
  $region12: #{rnn_forward.1} parent=0 // pred_region
    _
  $region13: #{rnn_forward.1} parent=0 // pred_fallthru
    _
  // Predicated region
  $region14: #{rnn_forward.1} parent=0 // pred_check
    _
  $region15: #{rnn_forward.1} parent=0 // pred_check_branch
    %17 = sbr.rel (0) target = $region17
  $region16: #{rnn_forward.1} parent=0 // pred_region
    _
  $region17: #{rnn_forward.1} parent=0 // pred_fallthru
    _
  // Predicated region
  $region18: #{rnn_forward.1} parent=0 // pred_check
    _
  $region19: #{rnn_forward.1} parent=0 // pred_check_branch
    %19 = sbr.rel (0) target = $region21
  $region20: #{rnn_forward.1} parent=0 // pred_region
    _
  $region21: #{rnn_forward.1} parent=0 // pred_fallthru
    _
  %v20 = vld [vmem:[%s1] sm:$0xff]
  %v21 = vld [vmem:[%s1 + $0x8] sm:$0xff]
  %v22 = vld [vmem:[%s2] sm:$0x1]
  %v23 = vld [vmem:[%s3] sm:$0xff]
  %v24 = vld [vmem:[%s3 + $0x8] sm:$0xff]
  %v25 = vld [vmem:[%s3 + $0x10] sm:$0xff]
  %v26 = vld [vmem:[%s3 + $0x18] sm:$0xff]
  %v27 = vld [vmem:[%s4] sm:$0x1]
  %v28 = vld [vmem:[%s0] sm:$0x3]
  %v30 = vlaneseq
  %v31 = vshrl.u32 %v30, 7
  %v32 = vsub.s32 0, %v31
  %v33 = vrot.slane %v22, %v32
  %vm35 = vcmask 130048
  %v37 = vsel %vm35, %v28, 0
  %39 = vmatprep.subr.mxu0 0.0
  %40 = vmatpush1.msra.mxu0 0.0
  %41 = vmatprep.subr.mxu0 0.0
  %42 = vmatpush1.msra.mxu0 0.0
  %43 = vmatprep.subr.mxu0 0.0
  %44 = vmatpush1.msra.mxu0 0.0
  %45 = vmatprep.subr.mxu0 0.0
  %46 = vmatpush1.msra.mxu0 0.0
  %47 = vmatprep.subr.mxu0 0.0
  %48 = vmatpush1.msra.mxu0 0.0
  %49 = vmatprep.subr.mxu0 0.0
  %50 = vmatpush1.msra.mxu0 0.0
  %51 = vmatprep.subr.mxu0 0.0
  %52 = vmatpush1.msra.mxu0 0.0
  %53 = vmatprep.subr.mxu0 0.0
  %54 = vmatpush1.msra.mxu0 0.0
  %55 = vmatprep.subr.mxu0 0.0
  %56 = vmatpush1.msra.mxu0 0.0
  %57 = vmatprep.subr.mxu0 0.0
  %58 = vmatpush1.msra.mxu0 0.0
  %59 = vmatprep.subr.mxu0 0.0
  %60 = vmatpush1.msra.mxu0 0.0
  %61 = vmatprep.subr.mxu0 0.0
  %62 = vmatpush1.msra.mxu0 0.0
  %63 = vmatprep.subr.mxu0 0.0
  %64 = vmatpush1.msra.mxu0 0.0
  %65 = vmatprep.subr.mxu0 0.0
  %66 = vmatpush1.msra.mxu0 0.0
  %67 = vmatprep.subr.mxu0 0.0
  %68 = vmatpush1.msra.mxu0 %v21
  %69 = vmatprep.subr.mxu0 0.0
  %70 = vmatpush1.msra.mxu0 %v20
  %71 = vmatprep.subr.mxu0 0.0
  %72 = vmatpush2.msra.mxu0 0.0
  %73 = vmatprep.subr.mxu0 0.0
  %74 = vmatpush2.msra.mxu0 0.0
  %75 = vmatprep.subr.mxu0 0.0
  %76 = vmatpush2.msra.mxu0 0.0
  %77 = vmatprep.subr.mxu0 0.0
  %78 = vmatpush2.msra.mxu0 0.0
  %79 = vmatprep.subr.mxu0 0.0
  %80 = vmatpush2.msra.mxu0 0.0
  %81 = vmatprep.subr.mxu0 0.0
  %82 = vmatpush2.msra.mxu0 0.0
  %83 = vmatprep.subr.mxu0 0.0
  %84 = vmatpush2.msra.mxu0 0.0
  %85 = vmatprep.subr.mxu0 0.0
  %86 = vmatpush2.msra.mxu0 0.0
  %87 = vmatprep.subr.mxu0 0.0
  %88 = vmatpush2.msra.mxu0 0.0
  %89 = vmatprep.subr.mxu0 0.0
  %90 = vmatpush2.msra.mxu0 0.0
  %91 = vmatprep.subr.mxu0 0.0
  %92 = vmatpush2.msra.mxu0 0.0
  %93 = vmatprep.subr.mxu0 0.0
  %94 = vmatpush2.msra.mxu0 0.0
  %95 = vmatprep.subr.mxu0 0.0
  %96 = vmatpush2.msra.mxu0 0.0
  %97 = vmatprep.subr.mxu0 0.0
  %98 = vmatpush2.msra.mxu0 0.0
  %99 = vmatprep.subr.mxu0 0.0
  %100 = vmatpush2.msra.mxu0 0.0
  %101 = vmatprep.subr.mxu0 0.0
  %102 = vmatpush2.msra.mxu0 0.0
  %103 = vmatprep.mubr.f32.mxu0 0.0
  %104 = vmatmul.mubr.f32.gmra.mxu0 %v37
  %v105 = vpop.f32.mrf.mxu0
  %v106 = vadd.f32 %v33, %v105
  %v107 = vpop.f32.mrf.mxu0
  %108 = vdwg.mxu0
  %v110 = vlaneseq
  %v111 = vshrl.u32 %v110, 7
  %v112 = vsub.s32 0, %v111
  %v113 = vrot.slane %v27, %v112
  %vm115 = vcmask 261120
  %v117 = vsel %vm115, 0.0, 0
  %119 = vmatprep.subr.mxu0 0.0
  %120 = vmatpush1.msra.mxu0 0.0
  %121 = vmatprep.subr.mxu0 0.0
  %122 = vmatpush1.msra.mxu0 0.0
  %123 = vmatprep.subr.mxu0 0.0
  %124 = vmatpush1.msra.mxu0 0.0
  %125 = vmatprep.subr.mxu0 0.0
  %126 = vmatpush1.msra.mxu0 0.0
  %127 = vmatprep.subr.mxu0 0.0
  %128 = vmatpush1.msra.mxu0 0.0
  %129 = vmatprep.subr.mxu0 0.0
  %130 = vmatpush1.msra.mxu0 0.0
  %131 = vmatprep.subr.mxu0 0.0
  %132 = vmatpush1.msra.mxu0 0.0
  %133 = vmatprep.subr.mxu0 0.0
  %134 = vmatpush1.msra.mxu0 0.0
  %135 = vmatprep.subr.mxu0 0.0
  %136 = vmatpush1.msra.mxu0 0.0
  %137 = vmatprep.subr.mxu0 0.0
  %138 = vmatpush1.msra.mxu0 0.0
  %139 = vmatprep.subr.mxu0 0.0
  %140 = vmatpush1.msra.mxu0 0.0
  %141 = vmatprep.subr.mxu0 0.0
  %142 = vmatpush1.msra.mxu0 0.0
  %143 = vmatprep.subr.mxu0 0.0
  %144 = vmatpush1.msra.mxu0 %v26
  %145 = vmatprep.subr.mxu0 0.0
  %146 = vmatpush1.msra.mxu0 %v25
  %147 = vmatprep.subr.mxu0 0.0
  %148 = vmatpush1.msra.mxu0 %v24
  %149 = vmatprep.subr.mxu0 0.0
  %150 = vmatpush1.msra.mxu0 %v23
  %151 = vmatprep.subr.mxu0 0.0
  %152 = vmatpush2.msra.mxu0 0.0
  %153 = vmatprep.subr.mxu0 0.0
  %154 = vmatpush2.msra.mxu0 0.0
  %155 = vmatprep.subr.mxu0 0.0
  %156 = vmatpush2.msra.mxu0 0.0
  %157 = vmatprep.subr.mxu0 0.0
  %158 = vmatpush2.msra.mxu0 0.0
  %159 = vmatprep.subr.mxu0 0.0
  %160 = vmatpush2.msra.mxu0 0.0
  %161 = vmatprep.subr.mxu0 0.0
  %162 = vmatpush2.msra.mxu0 0.0
  %163 = vmatprep.subr.mxu0 0.0
  %164 = vmatpush2.msra.mxu0 0.0
  %165 = vmatprep.subr.mxu0 0.0
  %166 = vmatpush2.msra.mxu0 0.0
  %167 = vmatprep.subr.mxu0 0.0
  %168 = vmatpush2.msra.mxu0 0.0
  %169 = vmatprep.subr.mxu0 0.0
  %170 = vmatpush2.msra.mxu0 0.0
  %171 = vmatprep.subr.mxu0 0.0
  %172 = vmatpush2.msra.mxu0 0.0
  %173 = vmatprep.subr.mxu0 0.0
  %174 = vmatpush2.msra.mxu0 0.0
  %175 = vmatprep.subr.mxu0 0.0
  %176 = vmatpush2.msra.mxu0 0.0
  %177 = vmatprep.subr.mxu0 0.0
  %178 = vmatpush2.msra.mxu0 0.0
  %179 = vmatprep.subr.mxu0 0.0
  %180 = vmatpush2.msra.mxu0 0.0
  %181 = vmatprep.subr.mxu0 0.0
  %182 = vmatpush2.msra.mxu0 0.0
  %183 = vmatprep.mubr.f32.mxu0 0.0
  %184 = vmatmul.mubr.f32.gmra.mxu0 %v117
  %v185 = vpop.f32.mrf.mxu0
  %v186 = vadd.f32 %v113, %v185
  %v187 = vpop.f32.mrf.mxu0
  %188 = vdwg.mxu0
  %v189 = vadd.f32 %v106, %v186
  %v190 = vxor.u32 %v189, 2147483648
  %v191 = vmul.f32 %v190, 1.442695
  %v192 = vpow.pop %v191
  %v193 = vadd.f32 %v192, 1.0
  %v194 = vrcp.pop %v193
  %v195 = vmul.f32 1.0, %v194
  %197 = vrot.lane.b32.xlu0 %v186, 64
  %v198 = vpop.permute.xlu0 %197
  %v200 = vmul.f32 %v195, %v198
  %202 = vrot.lane.b32.xlu0 %v200, 64
  %v203 = vpop.permute.xlu0 %202
  %v205 = vadd.f32 %v106, %v203
  %v206 = vtanh.pop %v205
  %v207 = vsub.f32 1.0, %v195
  %209 = vrot.lane.b32.xlu0 %v206, 96
  %v210 = vpop.permute.xlu0 %209
  %v212 = vmul.f32 %v207, %v210
  %v213 = vmul.f32 %v195, 0.0
  %v214 = vadd.f32 %v212, %v213
  %216 = vrot.lane.b32.xlu0 %v214, 96
  %v217 = vpop.permute.xlu0 %216
  %vm219 = vcmask 254976
  %220 = vst.msk [vmem:[%s5] sm:$0x3] %vm219, %v217
  %s221 = scalar_lea.vmem %s0, 2
  %v222 = vld [vmem:[%s221] sm:$0x3]
  %v224 = vsel %vm35, %v222, 0
  %226 = vmatprep.subr.mxu0 0.0
  %227 = vmatpush1.msra.mxu0 0.0
  %228 = vmatprep.subr.mxu0 0.0
  %229 = vmatpush1.msra.mxu0 0.0
  %230 = vmatprep.subr.mxu0 0.0
  %231 = vmatpush1.msra.mxu0 0.0
  %232 = vmatprep.subr.mxu0 0.0
  %233 = vmatpush1.msra.mxu0 0.0
  %234 = vmatprep.subr.mxu0 0.0
  %235 = vmatpush1.msra.mxu0 0.0
  %236 = vmatprep.subr.mxu0 0.0
  %237 = vmatpush1.msra.mxu0 0.0
  %238 = vmatprep.subr.mxu0 0.0
  %239 = vmatpush1.msra.mxu0 0.0
  %240 = vmatprep.subr.mxu0 0.0
  %241 = vmatpush1.msra.mxu0 0.0
  %242 = vmatprep.subr.mxu0 0.0
  %243 = vmatpush1.msra.mxu0 0.0
  %244 = vmatprep.subr.mxu0 0.0
  %245 = vmatpush1.msra.mxu0 0.0
  %246 = vmatprep.subr.mxu0 0.0
  %247 = vmatpush1.msra.mxu0 0.0
  %248 = vmatprep.subr.mxu0 0.0
  %249 = vmatpush1.msra.mxu0 0.0
  %250 = vmatprep.subr.mxu0 0.0
  %251 = vmatpush1.msra.mxu0 0.0
  %252 = vmatprep.subr.mxu0 0.0
  %253 = vmatpush1.msra.mxu0 0.0
  %254 = vmatprep.subr.mxu0 0.0
  %255 = vmatpush1.msra.mxu0 %v21
  %256 = vmatprep.subr.mxu0 0.0
  %257 = vmatpush1.msra.mxu0 %v20
  %258 = vmatprep.subr.mxu0 0.0
  %259 = vmatpush2.msra.mxu0 0.0
  %260 = vmatprep.subr.mxu0 0.0
  %261 = vmatpush2.msra.mxu0 0.0
  %262 = vmatprep.subr.mxu0 0.0
  %263 = vmatpush2.msra.mxu0 0.0
  %264 = vmatprep.subr.mxu0 0.0
  %265 = vmatpush2.msra.mxu0 0.0
  %266 = vmatprep.subr.mxu0 0.0
  %267 = vmatpush2.msra.mxu0 0.0
  %268 = vmatprep.subr.mxu0 0.0
  %269 = vmatpush2.msra.mxu0 0.0
  %270 = vmatprep.subr.mxu0 0.0
  %271 = vmatpush2.msra.mxu0 0.0
  %272 = vmatprep.subr.mxu0 0.0
  %273 = vmatpush2.msra.mxu0 0.0
  %274 = vmatprep.subr.mxu0 0.0
  %275 = vmatpush2.msra.mxu0 0.0
  %276 = vmatprep.subr.mxu0 0.0
  %277 = vmatpush2.msra.mxu0 0.0
  %278 = vmatprep.subr.mxu0 0.0
  %279 = vmatpush2.msra.mxu0 0.0
  %280 = vmatprep.subr.mxu0 0.0
  %281 = vmatpush2.msra.mxu0 0.0
  %282 = vmatprep.subr.mxu0 0.0
  %283 = vmatpush2.msra.mxu0 0.0
  %284 = vmatprep.subr.mxu0 0.0
  %285 = vmatpush2.msra.mxu0 0.0
  %286 = vmatprep.subr.mxu0 0.0
  %287 = vmatpush2.msra.mxu0 0.0
  %288 = vmatprep.subr.mxu0 0.0
  %289 = vmatpush2.msra.mxu0 0.0
  %290 = vmatprep.mubr.f32.mxu0 0.0
  %291 = vmatmul.mubr.f32.gmra.mxu0 %v224
  %v292 = vpop.f32.mrf.mxu0
  %v293 = vadd.f32 %v33, %v292
  %v294 = vpop.f32.mrf.mxu0
  %295 = vdwg.mxu0
  %v296 = vsel %vm115, %v217, 0
  %298 = vmatprep.subr.mxu0 0.0
  %299 = vmatpush1.msra.mxu0 0.0
  %300 = vmatprep.subr.mxu0 0.0
  %301 = vmatpush1.msra.mxu0 0.0
  %302 = vmatprep.subr.mxu0 0.0
  %303 = vmatpush1.msra.mxu0 0.0
  %304 = vmatprep.subr.mxu0 0.0
  %305 = vmatpush1.msra.mxu0 0.0
  %306 = vmatprep.subr.mxu0 0.0
  %307 = vmatpush1.msra.mxu0 0.0
  %308 = vmatprep.subr.mxu0 0.0
  %309 = vmatpush1.msra.mxu0 0.0
  %310 = vmatprep.subr.mxu0 0.0
  %311 = vmatpush1.msra.mxu0 0.0
  %312 = vmatprep.subr.mxu0 0.0
  %313 = vmatpush1.msra.mxu0 0.0
  %314 = vmatprep.subr.mxu0 0.0
  %315 = vmatpush1.msra.mxu0 0.0
  %316 = vmatprep.subr.mxu0 0.0
  %317 = vmatpush1.msra.mxu0 0.0
  %318 = vmatprep.subr.mxu0 0.0
  %319 = vmatpush1.msra.mxu0 0.0
  %320 = vmatprep.subr.mxu0 0.0
  %321 = vmatpush1.msra.mxu0 0.0
  %322 = vmatprep.subr.mxu0 0.0
  %323 = vmatpush1.msra.mxu0 %v26
  %324 = vmatprep.subr.mxu0 0.0
  %325 = vmatpush1.msra.mxu0 %v25
  %326 = vmatprep.subr.mxu0 0.0
  %327 = vmatpush1.msra.mxu0 %v24
  %328 = vmatprep.subr.mxu0 0.0
  %329 = vmatpush1.msra.mxu0 %v23
  %330 = vmatprep.subr.mxu0 0.0
  %331 = vmatpush2.msra.mxu0 0.0
  %332 = vmatprep.subr.mxu0 0.0
  %333 = vmatpush2.msra.mxu0 0.0
  %334 = vmatprep.subr.mxu0 0.0
  %335 = vmatpush2.msra.mxu0 0.0
  %336 = vmatprep.subr.mxu0 0.0
  %337 = vmatpush2.msra.mxu0 0.0
  %338 = vmatprep.subr.mxu0 0.0
  %339 = vmatpush2.msra.mxu0 0.0
  %340 = vmatprep.subr.mxu0 0.0
  %341 = vmatpush2.msra.mxu0 0.0
  %342 = vmatprep.subr.mxu0 0.0
  %343 = vmatpush2.msra.mxu0 0.0
  %344 = vmatprep.subr.mxu0 0.0
  %345 = vmatpush2.msra.mxu0 0.0
  %346 = vmatprep.subr.mxu0 0.0
  %347 = vmatpush2.msra.mxu0 0.0
  %348 = vmatprep.subr.mxu0 0.0
  %349 = vmatpush2.msra.mxu0 0.0
  %350 = vmatprep.subr.mxu0 0.0
  %351 = vmatpush2.msra.mxu0 0.0
  %352 = vmatprep.subr.mxu0 0.0
  %353 = vmatpush2.msra.mxu0 0.0
  %354 = vmatprep.subr.mxu0 0.0
  %355 = vmatpush2.msra.mxu0 0.0
  %356 = vmatprep.subr.mxu0 0.0
  %357 = vmatpush2.msra.mxu0 0.0
  %358 = vmatprep.subr.mxu0 0.0
  %359 = vmatpush2.msra.mxu0 0.0
  %360 = vmatprep.subr.mxu0 0.0
  %361 = vmatpush2.msra.mxu0 0.0
  %362 = vmatprep.mubr.f32.mxu0 0.0
  %363 = vmatmul.mubr.f32.gmra.mxu0 %v296
  %v364 = vpop.f32.mrf.mxu0
  %v365 = vadd.f32 %v113, %v364
  %v366 = vpop.f32.mrf.mxu0
  %367 = vdwg.mxu0
  %v368 = vadd.f32 %v293, %v365
  %v369 = vxor.u32 %v368, 2147483648
  %v370 = vmul.f32 %v369, 1.442695
  %v371 = vpow.pop %v370
  %v372 = vadd.f32 %v371, 1.0
  %v373 = vrcp.pop %v372
  %v374 = vmul.f32 1.0, %v373
  %376 = vrot.lane.b32.xlu0 %v365, 64
  %v377 = vpop.permute.xlu0 %376
  %v379 = vmul.f32 %v374, %v377
  %381 = vrot.lane.b32.xlu0 %v379, 64
  %v382 = vpop.permute.xlu0 %381
  %v384 = vadd.f32 %v293, %v382
  %v385 = vtanh.pop %v384
  %v386 = vsub.f32 1.0, %v374
  %388 = vrot.lane.b32.xlu0 %v385, 96
  %v389 = vpop.permute.xlu0 %388
  %v391 = vmul.f32 %v386, %v389
  %v392 = vmul.f32 %v374, %v214
  %v393 = vadd.f32 %v391, %v392
  %395 = vrot.lane.b32.xlu0 %v393, 96
  %v396 = vpop.permute.xlu0 %395
  %s398 = scalar_lea.vmem %s5, 2
  %399 = vst.msk [vmem:[%s398] sm:$0x3] %vm219, %v396
  %s400 = scalar_lea.vmem %s0, 4
  %v401 = vld [vmem:[%s400] sm:$0x3]
  %v403 = vsel %vm35, %v401, 0
  %405 = vmatprep.subr.mxu0 0.0
  %406 = vmatpush1.msra.mxu0 0.0
  %407 = vmatprep.subr.mxu0 0.0
  %408 = vmatpush1.msra.mxu0 0.0
  %409 = vmatprep.subr.mxu0 0.0
  %410 = vmatpush1.msra.mxu0 0.0
  %411 = vmatprep.subr.mxu0 0.0
  %412 = vmatpush1.msra.mxu0 0.0
  %413 = vmatprep.subr.mxu0 0.0
  %414 = vmatpush1.msra.mxu0 0.0
  %415 = vmatprep.subr.mxu0 0.0
  %416 = vmatpush1.msra.mxu0 0.0
  %417 = vmatprep.subr.mxu0 0.0
  %418 = vmatpush1.msra.mxu0 0.0
  %419 = vmatprep.subr.mxu0 0.0
  %420 = vmatpush1.msra.mxu0 0.0
  %421 = vmatprep.subr.mxu0 0.0
  %422 = vmatpush1.msra.mxu0 0.0
  %423 = vmatprep.subr.mxu0 0.0
  %424 = vmatpush1.msra.mxu0 0.0
  %425 = vmatprep.subr.mxu0 0.0
  %426 = vmatpush1.msra.mxu0 0.0
  %427 = vmatprep.subr.mxu0 0.0
  %428 = vmatpush1.msra.mxu0 0.0
  %429 = vmatprep.subr.mxu0 0.0
  %430 = vmatpush1.msra.mxu0 0.0
  %431 = vmatprep.subr.mxu0 0.0
  %432 = vmatpush1.msra.mxu0 0.0
  %433 = vmatprep.subr.mxu0 0.0
  %434 = vmatpush1.msra.mxu0 %v21
  %435 = vmatprep.subr.mxu0 0.0
  %436 = vmatpush1.msra.mxu0 %v20
  %437 = vmatprep.subr.mxu0 0.0
  %438 = vmatpush2.msra.mxu0 0.0
  %439 = vmatprep.subr.mxu0 0.0
  %440 = vmatpush2.msra.mxu0 0.0
  %441 = vmatprep.subr.mxu0 0.0
  %442 = vmatpush2.msra.mxu0 0.0
  %443 = vmatprep.subr.mxu0 0.0
  %444 = vmatpush2.msra.mxu0 0.0
  %445 = vmatprep.subr.mxu0 0.0
  %446 = vmatpush2.msra.mxu0 0.0
  %447 = vmatprep.subr.mxu0 0.0
  %448 = vmatpush2.msra.mxu0 0.0
  %449 = vmatprep.subr.mxu0 0.0
  %450 = vmatpush2.msra.mxu0 0.0
  %451 = vmatprep.subr.mxu0 0.0
  %452 = vmatpush2.msra.mxu0 0.0
  %453 = vmatprep.subr.mxu0 0.0
  %454 = vmatpush2.msra.mxu0 0.0
  %455 = vmatprep.subr.mxu0 0.0
  %456 = vmatpush2.msra.mxu0 0.0
  %457 = vmatprep.subr.mxu0 0.0
  %458 = vmatpush2.msra.mxu0 0.0
  %459 = vmatprep.subr.mxu0 0.0
  %460 = vmatpush2.msra.mxu0 0.0
  %461 = vmatprep.subr.mxu0 0.0
  %462 = vmatpush2.msra.mxu0 0.0
  %463 = vmatprep.subr.mxu0 0.0
  %464 = vmatpush2.msra.mxu0 0.0
  %465 = vmatprep.subr.mxu0 0.0
  %466 = vmatpush2.msra.mxu0 0.0
  %467 = vmatprep.subr.mxu0 0.0
  %468 = vmatpush2.msra.mxu0 0.0
  %469 = vmatprep.mubr.f32.mxu0 0.0
  %470 = vmatmul.mubr.f32.gmra.mxu0 %v403
  %v471 = vpop.f32.mrf.mxu0
  %v472 = vadd.f32 %v33, %v471
  %v473 = vpop.f32.mrf.mxu0
  %474 = vdwg.mxu0
  %v475 = vsel %vm115, %v396, 0
  %477 = vmatprep.subr.mxu0 0.0
  %478 = vmatpush1.msra.mxu0 0.0
  %479 = vmatprep.subr.mxu0 0.0
  %480 = vmatpush1.msra.mxu0 0.0
  %481 = vmatprep.subr.mxu0 0.0
  %482 = vmatpush1.msra.mxu0 0.0
  %483 = vmatprep.subr.mxu0 0.0
  %484 = vmatpush1.msra.mxu0 0.0
  %485 = vmatprep.subr.mxu0 0.0
  %486 = vmatpush1.msra.mxu0 0.0
  %487 = vmatprep.subr.mxu0 0.0
  %488 = vmatpush1.msra.mxu0 0.0
  %489 = vmatprep.subr.mxu0 0.0
  %490 = vmatpush1.msra.mxu0 0.0
  %491 = vmatprep.subr.mxu0 0.0
  %492 = vmatpush1.msra.mxu0 0.0
  %493 = vmatprep.subr.mxu0 0.0
  %494 = vmatpush1.msra.mxu0 0.0
  %495 = vmatprep.subr.mxu0 0.0
  %496 = vmatpush1.msra.mxu0 0.0
  %497 = vmatprep.subr.mxu0 0.0
  %498 = vmatpush1.msra.mxu0 0.0
  %499 = vmatprep.subr.mxu0 0.0
  %500 = vmatpush1.msra.mxu0 0.0
  %501 = vmatprep.subr.mxu0 0.0
  %502 = vmatpush1.msra.mxu0 %v26
  %503 = vmatprep.subr.mxu0 0.0
  %504 = vmatpush1.msra.mxu0 %v25
  %505 = vmatprep.subr.mxu0 0.0
  %506 = vmatpush1.msra.mxu0 %v24
  %507 = vmatprep.subr.mxu0 0.0
  %508 = vmatpush1.msra.mxu0 %v23
  %509 = vmatprep.subr.mxu0 0.0
  %510 = vmatpush2.msra.mxu0 0.0
  %511 = vmatprep.subr.mxu0 0.0
  %512 = vmatpush2.msra.mxu0 0.0
  %513 = vmatprep.subr.mxu0 0.0
  %514 = vmatpush2.msra.mxu0 0.0
  %515 = vmatprep.subr.mxu0 0.0
  %516 = vmatpush2.msra.mxu0 0.0
  %517 = vmatprep.subr.mxu0 0.0
  %518 = vmatpush2.msra.mxu0 0.0
  %519 = vmatprep.subr.mxu0 0.0
  %520 = vmatpush2.msra.mxu0 0.0
  %521 = vmatprep.subr.mxu0 0.0
  %522 = vmatpush2.msra.mxu0 0.0
  %523 = vmatprep.subr.mxu0 0.0
  %524 = vmatpush2.msra.mxu0 0.0
  %525 = vmatprep.subr.mxu0 0.0
  %526 = vmatpush2.msra.mxu0 0.0
  %527 = vmatprep.subr.mxu0 0.0
  %528 = vmatpush2.msra.mxu0 0.0
  %529 = vmatprep.subr.mxu0 0.0
  %530 = vmatpush2.msra.mxu0 0.0
  %531 = vmatprep.subr.mxu0 0.0
  %532 = vmatpush2.msra.mxu0 0.0
  %533 = vmatprep.subr.mxu0 0.0
  %534 = vmatpush2.msra.mxu0 0.0
  %535 = vmatprep.subr.mxu0 0.0
  %536 = vmatpush2.msra.mxu0 0.0
  %537 = vmatprep.subr.mxu0 0.0
  %538 = vmatpush2.msra.mxu0 0.0
  %539 = vmatprep.subr.mxu0 0.0
  %540 = vmatpush2.msra.mxu0 0.0
  %541 = vmatprep.mubr.f32.mxu0 0.0
  %542 = vmatmul.mubr.f32.gmra.mxu0 %v475
  %v543 = vpop.f32.mrf.mxu0
  %v544 = vadd.f32 %v113, %v543
  %v545 = vpop.f32.mrf.mxu0
  %546 = vdwg.mxu0
  %v547 = vadd.f32 %v472, %v544
  %v548 = vxor.u32 %v547, 2147483648
  %v549 = vmul.f32 %v548, 1.442695
  %v550 = vpow.pop %v549
  %v551 = vadd.f32 %v550, 1.0
  %v552 = vrcp.pop %v551
  %v553 = vmul.f32 1.0, %v552
  %555 = vrot.lane.b32.xlu0 %v544, 64
  %v556 = vpop.permute.xlu0 %555
  %v558 = vmul.f32 %v553, %v556
  %560 = vrot.lane.b32.xlu0 %v558, 64
  %v561 = vpop.permute.xlu0 %560
  %v563 = vadd.f32 %v472, %v561
  %v564 = vtanh.pop %v563
  %v565 = vsub.f32 1.0, %v553
  %567 = vrot.lane.b32.xlu0 %v564, 96
  %v568 = vpop.permute.xlu0 %567
  %v570 = vmul.f32 %v565, %v568
  %v571 = vmul.f32 %v553, %v393
  %v572 = vadd.f32 %v570, %v571
  %574 = vrot.lane.b32.xlu0 %v572, 96
  %v575 = vpop.permute.xlu0 %574
  %s577 = scalar_lea.vmem %s5, 4
  %578 = vst.msk [vmem:[%s577] sm:$0x3] %vm219, %v575
  %s579 = scalar_lea.vmem %s0, 6
  %v580 = vld [vmem:[%s579] sm:$0x3]
  %v582 = vsel %vm35, %v580, 0
  %584 = vmatprep.subr.mxu0 0.0
  %585 = vmatpush1.msra.mxu0 0.0
  %586 = vmatprep.subr.mxu0 0.0
  %587 = vmatpush1.msra.mxu0 0.0
  %588 = vmatprep.subr.mxu0 0.0
  %589 = vmatpush1.msra.mxu0 0.0
  %590 = vmatprep.subr.mxu0 0.0
  %591 = vmatpush1.msra.mxu0 0.0
  %592 = vmatprep.subr.mxu0 0.0
  %593 = vmatpush1.msra.mxu0 0.0
  %594 = vmatprep.subr.mxu0 0.0
  %595 = vmatpush1.msra.mxu0 0.0
  %596 = vmatprep.subr.mxu0 0.0
  %597 = vmatpush1.msra.mxu0 0.0
  %598 = vmatprep.subr.mxu0 0.0
  %599 = vmatpush1.msra.mxu0 0.0
  %600 = vmatprep.subr.mxu0 0.0
  %601 = vmatpush1.msra.mxu0 0.0
  %602 = vmatprep.subr.mxu0 0.0
  %603 = vmatpush1.msra.mxu0 0.0
  %604 = vmatprep.subr.mxu0 0.0
  %605 = vmatpush1.msra.mxu0 0.0
  %606 = vmatprep.subr.mxu0 0.0
  %607 = vmatpush1.msra.mxu0 0.0
  %608 = vmatprep.subr.mxu0 0.0
  %609 = vmatpush1.msra.mxu0 0.0
  %610 = vmatprep.subr.mxu0 0.0
  %611 = vmatpush1.msra.mxu0 0.0
  %612 = vmatprep.subr.mxu0 0.0
  %613 = vmatpush1.msra.mxu0 %v21
  %614 = vmatprep.subr.mxu0 0.0
  %615 = vmatpush1.msra.mxu0 %v20
  %616 = vmatprep.subr.mxu0 0.0
  %617 = vmatpush2.msra.mxu0 0.0
  %618 = vmatprep.subr.mxu0 0.0
  %619 = vmatpush2.msra.mxu0 0.0
  %620 = vmatprep.subr.mxu0 0.0
  %621 = vmatpush2.msra.mxu0 0.0
  %622 = vmatprep.subr.mxu0 0.0
  %623 = vmatpush2.msra.mxu0 0.0
  %624 = vmatprep.subr.mxu0 0.0
  %625 = vmatpush2.msra.mxu0 0.0
  %626 = vmatprep.subr.mxu0 0.0
  %627 = vmatpush2.msra.mxu0 0.0
  %628 = vmatprep.subr.mxu0 0.0
  %629 = vmatpush2.msra.mxu0 0.0
  %630 = vmatprep.subr.mxu0 0.0
  %631 = vmatpush2.msra.mxu0 0.0
  %632 = vmatprep.subr.mxu0 0.0
  %633 = vmatpush2.msra.mxu0 0.0
  %634 = vmatprep.subr.mxu0 0.0
  %635 = vmatpush2.msra.mxu0 0.0
  %636 = vmatprep.subr.mxu0 0.0
  %637 = vmatpush2.msra.mxu0 0.0
  %638 = vmatprep.subr.mxu0 0.0
  %639 = vmatpush2.msra.mxu0 0.0
  %640 = vmatprep.subr.mxu0 0.0
  %641 = vmatpush2.msra.mxu0 0.0
  %642 = vmatprep.subr.mxu0 0.0
  %643 = vmatpush2.msra.mxu0 0.0
  %644 = vmatprep.subr.mxu0 0.0
  %645 = vmatpush2.msra.mxu0 0.0
  %646 = vmatprep.subr.mxu0 0.0
  %647 = vmatpush2.msra.mxu0 0.0
  %648 = vmatprep.mubr.f32.mxu0 0.0
  %649 = vmatmul.mubr.f32.gmra.mxu0 %v582
  %v650 = vpop.f32.mrf.mxu0
  %v651 = vadd.f32 %v33, %v650
  %v652 = vpop.f32.mrf.mxu0
  %653 = vdwg.mxu0
  %v654 = vsel %vm115, %v575, 0
  %656 = vmatprep.subr.mxu0 0.0
  %657 = vmatpush1.msra.mxu0 0.0
  %658 = vmatprep.subr.mxu0 0.0
  %659 = vmatpush1.msra.mxu0 0.0
  %660 = vmatprep.subr.mxu0 0.0
  %661 = vmatpush1.msra.mxu0 0.0
  %662 = vmatprep.subr.mxu0 0.0
  %663 = vmatpush1.msra.mxu0 0.0
  %664 = vmatprep.subr.mxu0 0.0
  %665 = vmatpush1.msra.mxu0 0.0
  %666 = vmatprep.subr.mxu0 0.0
  %667 = vmatpush1.msra.mxu0 0.0
  %668 = vmatprep.subr.mxu0 0.0
  %669 = vmatpush1.msra.mxu0 0.0
  %670 = vmatprep.subr.mxu0 0.0
  %671 = vmatpush1.msra.mxu0 0.0
  %672 = vmatprep.subr.mxu0 0.0
  %673 = vmatpush1.msra.mxu0 0.0
  %674 = vmatprep.subr.mxu0 0.0
  %675 = vmatpush1.msra.mxu0 0.0
  %676 = vmatprep.subr.mxu0 0.0
  %677 = vmatpush1.msra.mxu0 0.0
  %678 = vmatprep.subr.mxu0 0.0
  %679 = vmatpush1.msra.mxu0 0.0
  %680 = vmatprep.subr.mxu0 0.0
  %681 = vmatpush1.msra.mxu0 %v26
  %682 = vmatprep.subr.mxu0 0.0
  %683 = vmatpush1.msra.mxu0 %v25
  %684 = vmatprep.subr.mxu0 0.0
  %685 = vmatpush1.msra.mxu0 %v24
  %686 = vmatprep.subr.mxu0 0.0
  %687 = vmatpush1.msra.mxu0 %v23
  %688 = vmatprep.subr.mxu0 0.0
  %689 = vmatpush2.msra.mxu0 0.0
  %690 = vmatprep.subr.mxu0 0.0
  %691 = vmatpush2.msra.mxu0 0.0
  %692 = vmatprep.subr.mxu0 0.0
  %693 = vmatpush2.msra.mxu0 0.0
  %694 = vmatprep.subr.mxu0 0.0
  %695 = vmatpush2.msra.mxu0 0.0
  %696 = vmatprep.subr.mxu0 0.0
  %697 = vmatpush2.msra.mxu0 0.0
  %698 = vmatprep.subr.mxu0 0.0
  %699 = vmatpush2.msra.mxu0 0.0
  %700 = vmatprep.subr.mxu0 0.0
  %701 = vmatpush2.msra.mxu0 0.0
  %702 = vmatprep.subr.mxu0 0.0
  %703 = vmatpush2.msra.mxu0 0.0
  %704 = vmatprep.subr.mxu0 0.0
  %705 = vmatpush2.msra.mxu0 0.0
  %706 = vmatprep.subr.mxu0 0.0
  %707 = vmatpush2.msra.mxu0 0.0
  %708 = vmatprep.subr.mxu0 0.0
  %709 = vmatpush2.msra.mxu0 0.0
  %710 = vmatprep.subr.mxu0 0.0
  %711 = vmatpush2.msra.mxu0 0.0
  %712 = vmatprep.subr.mxu0 0.0
  %713 = vmatpush2.msra.mxu0 0.0
  %714 = vmatprep.subr.mxu0 0.0
  %715 = vmatpush2.msra.mxu0 0.0
  %716 = vmatprep.subr.mxu0 0.0
  %717 = vmatpush2.msra.mxu0 0.0
  %718 = vmatprep.subr.mxu0 0.0
  %719 = vmatpush2.msra.mxu0 0.0
  %720 = vmatprep.mubr.f32.mxu0 0.0
  %721 = vmatmul.mubr.f32.gmra.mxu0 %v654
  %v722 = vpop.f32.mrf.mxu0
  %v723 = vadd.f32 %v113, %v722
  %v724 = vpop.f32.mrf.mxu0
  %725 = vdwg.mxu0
  %v726 = vadd.f32 %v651, %v723
  %v727 = vxor.u32 %v726, 2147483648
  %v728 = vmul.f32 %v727, 1.442695
  %v729 = vpow.pop %v728
  %v730 = vadd.f32 %v729, 1.0
  %v731 = vrcp.pop %v730
  %v732 = vmul.f32 1.0, %v731
  %734 = vrot.lane.b32.xlu0 %v723, 64
  %v735 = vpop.permute.xlu0 %734
  %v737 = vmul.f32 %v732, %v735
  %739 = vrot.lane.b32.xlu0 %v737, 64
  %v740 = vpop.permute.xlu0 %739
  %v742 = vadd.f32 %v651, %v740
  %v743 = vtanh.pop %v742
  %v744 = vsub.f32 1.0, %v732
  %746 = vrot.lane.b32.xlu0 %v743, 96
  %v747 = vpop.permute.xlu0 %746
  %v749 = vmul.f32 %v744, %v747
  %v750 = vmul.f32 %v732, %v572
  %v751 = vadd.f32 %v749, %v750
  %753 = vrot.lane.b32.xlu0 %v751, 96
  %v754 = vpop.permute.xlu0 %753
  %s756 = scalar_lea.vmem %s5, 6
  %757 = vst.msk [vmem:[%s756] sm:$0x3] %vm219, %v754
  %s758 = scalar_lea.vmem %s0, 8
  %v759 = vld [vmem:[%s758] sm:$0x3]
  %v761 = vsel %vm35, %v759, 0
  %763 = vmatprep.subr.mxu0 0.0
  %764 = vmatpush1.msra.mxu0 0.0
  %765 = vmatprep.subr.mxu0 0.0
  %766 = vmatpush1.msra.mxu0 0.0
  %767 = vmatprep.subr.mxu0 0.0
  %768 = vmatpush1.msra.mxu0 0.0
  %769 = vmatprep.subr.mxu0 0.0
  %770 = vmatpush1.msra.mxu0 0.0
  %771 = vmatprep.subr.mxu0 0.0
  %772 = vmatpush1.msra.mxu0 0.0
  %773 = vmatprep.subr.mxu0 0.0
  %774 = vmatpush1.msra.mxu0 0.0
  %775 = vmatprep.subr.mxu0 0.0
  %776 = vmatpush1.msra.mxu0 0.0
  %777 = vmatprep.subr.mxu0 0.0
  %778 = vmatpush1.msra.mxu0 0.0
  %779 = vmatprep.subr.mxu0 0.0
  %780 = vmatpush1.msra.mxu0 0.0
  %781 = vmatprep.subr.mxu0 0.0
  %782 = vmatpush1.msra.mxu0 0.0
  %783 = vmatprep.subr.mxu0 0.0
  %784 = vmatpush1.msra.mxu0 0.0
  %785 = vmatprep.subr.mxu0 0.0
  %786 = vmatpush1.msra.mxu0 0.0
  %787 = vmatprep.subr.mxu0 0.0
  %788 = vmatpush1.msra.mxu0 0.0
  %789 = vmatprep.subr.mxu0 0.0
  %790 = vmatpush1.msra.mxu0 0.0
  %791 = vmatprep.subr.mxu0 0.0
  %792 = vmatpush1.msra.mxu0 %v21
  %793 = vmatprep.subr.mxu0 0.0
  %794 = vmatpush1.msra.mxu0 %v20
  %795 = vmatprep.subr.mxu0 0.0
  %796 = vmatpush2.msra.mxu0 0.0
  %797 = vmatprep.subr.mxu0 0.0
  %798 = vmatpush2.msra.mxu0 0.0
  %799 = vmatprep.subr.mxu0 0.0
  %800 = vmatpush2.msra.mxu0 0.0
  %801 = vmatprep.subr.mxu0 0.0
  %802 = vmatpush2.msra.mxu0 0.0
  %803 = vmatprep.subr.mxu0 0.0
  %804 = vmatpush2.msra.mxu0 0.0
  %805 = vmatprep.subr.mxu0 0.0
  %806 = vmatpush2.msra.mxu0 0.0
  %807 = vmatprep.subr.mxu0 0.0
  %808 = vmatpush2.msra.mxu0 0.0
  %809 = vmatprep.subr.mxu0 0.0
  %810 = vmatpush2.msra.mxu0 0.0
  %811 = vmatprep.subr.mxu0 0.0
  %812 = vmatpush2.msra.mxu0 0.0
  %813 = vmatprep.subr.mxu0 0.0
  %814 = vmatpush2.msra.mxu0 0.0
  %815 = vmatprep.subr.mxu0 0.0
  %816 = vmatpush2.msra.mxu0 0.0
  %817 = vmatprep.subr.mxu0 0.0
  %818 = vmatpush2.msra.mxu0 0.0
  %819 = vmatprep.subr.mxu0 0.0
  %820 = vmatpush2.msra.mxu0 0.0
  %821 = vmatprep.subr.mxu0 0.0
  %822 = vmatpush2.msra.mxu0 0.0
  %823 = vmatprep.subr.mxu0 0.0
  %824 = vmatpush2.msra.mxu0 0.0
  %825 = vmatprep.subr.mxu0 0.0
  %826 = vmatpush2.msra.mxu0 0.0
  %827 = vmatprep.mubr.f32.mxu0 0.0
  %828 = vmatmul.mubr.f32.gmra.mxu0 %v761
  %v829 = vpop.f32.mrf.mxu0
  %v830 = vadd.f32 %v33, %v829
  %v831 = vpop.f32.mrf.mxu0
  %832 = vdwg.mxu0
  %v833 = vsel %vm115, %v754, 0
  %835 = vmatprep.subr.mxu0 0.0
  %836 = vmatpush1.msra.mxu0 0.0
  %837 = vmatprep.subr.mxu0 0.0
  %838 = vmatpush1.msra.mxu0 0.0
  %839 = vmatprep.subr.mxu0 0.0
  %840 = vmatpush1.msra.mxu0 0.0
  %841 = vmatprep.subr.mxu0 0.0
  %842 = vmatpush1.msra.mxu0 0.0
  %843 = vmatprep.subr.mxu0 0.0
  %844 = vmatpush1.msra.mxu0 0.0
  %845 = vmatprep.subr.mxu0 0.0
  %846 = vmatpush1.msra.mxu0 0.0
  %847 = vmatprep.subr.mxu0 0.0
  %848 = vmatpush1.msra.mxu0 0.0
  %849 = vmatprep.subr.mxu0 0.0
  %850 = vmatpush1.msra.mxu0 0.0
  %851 = vmatprep.subr.mxu0 0.0
  %852 = vmatpush1.msra.mxu0 0.0
  %853 = vmatprep.subr.mxu0 0.0
  %854 = vmatpush1.msra.mxu0 0.0
  %855 = vmatprep.subr.mxu0 0.0
  %856 = vmatpush1.msra.mxu0 0.0
  %857 = vmatprep.subr.mxu0 0.0
  %858 = vmatpush1.msra.mxu0 0.0
  %859 = vmatprep.subr.mxu0 0.0
  %860 = vmatpush1.msra.mxu0 %v26
  %861 = vmatprep.subr.mxu0 0.0
  %862 = vmatpush1.msra.mxu0 %v25
  %863 = vmatprep.subr.mxu0 0.0
  %864 = vmatpush1.msra.mxu0 %v24
  %865 = vmatprep.subr.mxu0 0.0
  %866 = vmatpush1.msra.mxu0 %v23
  %867 = vmatprep.subr.mxu0 0.0
  %868 = vmatpush2.msra.mxu0 0.0
  %869 = vmatprep.subr.mxu0 0.0
  %870 = vmatpush2.msra.mxu0 0.0
  %871 = vmatprep.subr.mxu0 0.0
  %872 = vmatpush2.msra.mxu0 0.0
  %873 = vmatprep.subr.mxu0 0.0
  %874 = vmatpush2.msra.mxu0 0.0
  %875 = vmatprep.subr.mxu0 0.0
  %876 = vmatpush2.msra.mxu0 0.0
  %877 = vmatprep.subr.mxu0 0.0
  %878 = vmatpush2.msra.mxu0 0.0
  %879 = vmatprep.subr.mxu0 0.0
  %880 = vmatpush2.msra.mxu0 0.0
  %881 = vmatprep.subr.mxu0 0.0
  %882 = vmatpush2.msra.mxu0 0.0
  %883 = vmatprep.subr.mxu0 0.0
  %884 = vmatpush2.msra.mxu0 0.0
  %885 = vmatprep.subr.mxu0 0.0
  %886 = vmatpush2.msra.mxu0 0.0
  %887 = vmatprep.subr.mxu0 0.0
  %888 = vmatpush2.msra.mxu0 0.0
  %889 = vmatprep.subr.mxu0 0.0
  %890 = vmatpush2.msra.mxu0 0.0
  %891 = vmatprep.subr.mxu0 0.0
  %892 = vmatpush2.msra.mxu0 0.0
  %893 = vmatprep.subr.mxu0 0.0
  %894 = vmatpush2.msra.mxu0 0.0
  %895 = vmatprep.subr.mxu0 0.0
  %896 = vmatpush2.msra.mxu0 0.0
  %897 = vmatprep.subr.mxu0 0.0
  %898 = vmatpush2.msra.mxu0 0.0
  %899 = vmatprep.mubr.f32.mxu0 0.0
  %900 = vmatmul.mubr.f32.gmra.mxu0 %v833
  %v901 = vpop.f32.mrf.mxu0
  %v902 = vadd.f32 %v113, %v901
  %v903 = vpop.f32.mrf.mxu0
  %904 = vdwg.mxu0
  %v905 = vadd.f32 %v830, %v902
  %v906 = vxor.u32 %v905, 2147483648
  %v907 = vmul.f32 %v906, 1.442695
  %v908 = vpow.pop %v907
  %v909 = vadd.f32 %v908, 1.0
  %v910 = vrcp.pop %v909
  %v911 = vmul.f32 1.0, %v910
  %913 = vrot.lane.b32.xlu0 %v902, 64
  %v914 = vpop.permute.xlu0 %913
  %v916 = vmul.f32 %v911, %v914
  %918 = vrot.lane.b32.xlu0 %v916, 64
  %v919 = vpop.permute.xlu0 %918
  %v921 = vadd.f32 %v830, %v919
  %v922 = vtanh.pop %v921
  %v923 = vsub.f32 1.0, %v911
  %925 = vrot.lane.b32.xlu0 %v922, 96
  %v926 = vpop.permute.xlu0 %925
  %v928 = vmul.f32 %v923, %v926
  %v929 = vmul.f32 %v911, %v751
  %v930 = vadd.f32 %v928, %v929
  %932 = vrot.lane.b32.xlu0 %v930, 96
  %v933 = vpop.permute.xlu0 %932
  %s935 = scalar_lea.vmem %s5, 8
  %936 = vst.msk [vmem:[%s935] sm:$0x3] %vm219, %v933
  %s937 = scalar_lea.vmem %s0, 10
  %v938 = vld [vmem:[%s937] sm:$0x3]
  %v940 = vsel %vm35, %v938, 0
  %942 = vmatprep.subr.mxu0 0.0
  %943 = vmatpush1.msra.mxu0 0.0
  %944 = vmatprep.subr.mxu0 0.0
  %945 = vmatpush1.msra.mxu0 0.0
  %946 = vmatprep.subr.mxu0 0.0
  %947 = vmatpush1.msra.mxu0 0.0
  %948 = vmatprep.subr.mxu0 0.0
  %949 = vmatpush1.msra.mxu0 0.0
  %950 = vmatprep.subr.mxu0 0.0
  %951 = vmatpush1.msra.mxu0 0.0
  %952 = vmatprep.subr.mxu0 0.0
  %953 = vmatpush1.msra.mxu0 0.0
  %954 = vmatprep.subr.mxu0 0.0
  %955 = vmatpush1.msra.mxu0 0.0
  %956 = vmatprep.subr.mxu0 0.0
  %957 = vmatpush1.msra.mxu0 0.0
  %958 = vmatprep.subr.mxu0 0.0
  %959 = vmatpush1.msra.mxu0 0.0
  %960 = vmatprep.subr.mxu0 0.0
  %961 = vmatpush1.msra.mxu0 0.0
  %962 = vmatprep.subr.mxu0 0.0
  %963 = vmatpush1.msra.mxu0 0.0
  %964 = vmatprep.subr.mxu0 0.0
  %965 = vmatpush1.msra.mxu0 0.0
  %966 = vmatprep.subr.mxu0 0.0
  %967 = vmatpush1.msra.mxu0 0.0
  %968 = vmatprep.subr.mxu0 0.0
  %969 = vmatpush1.msra.mxu0 0.0
  %970 = vmatprep.subr.mxu0 0.0
  %971 = vmatpush1.msra.mxu0 %v21
  %972 = vmatprep.subr.mxu0 0.0
  %973 = vmatpush1.msra.mxu0 %v20
  %974 = vmatprep.subr.mxu0 0.0
  %975 = vmatpush2.msra.mxu0 0.0
  %976 = vmatprep.subr.mxu0 0.0
  %977 = vmatpush2.msra.mxu0 0.0
  %978 = vmatprep.subr.mxu0 0.0
  %979 = vmatpush2.msra.mxu0 0.0
  %980 = vmatprep.subr.mxu0 0.0
  %981 = vmatpush2.msra.mxu0 0.0
  %982 = vmatprep.subr.mxu0 0.0
  %983 = vmatpush2.msra.mxu0 0.0
  %984 = vmatprep.subr.mxu0 0.0
  %985 = vmatpush2.msra.mxu0 0.0
  %986 = vmatprep.subr.mxu0 0.0
  %987 = vmatpush2.msra.mxu0 0.0
  %988 = vmatprep.subr.mxu0 0.0
  %989 = vmatpush2.msra.mxu0 0.0
  %990 = vmatprep.subr.mxu0 0.0
  %991 = vmatpush2.msra.mxu0 0.0
  %992 = vmatprep.subr.mxu0 0.0
  %993 = vmatpush2.msra.mxu0 0.0
  %994 = vmatprep.subr.mxu0 0.0
  %995 = vmatpush2.msra.mxu0 0.0
  %996 = vmatprep.subr.mxu0 0.0
  %997 = vmatpush2.msra.mxu0 0.0
  %998 = vmatprep.subr.mxu0 0.0
  %999 = vmatpush2.msra.mxu0 0.0
  %1000 = vmatprep.subr.mxu0 0.0
  %1001 = vmatpush2.msra.mxu0 0.0
  %1002 = vmatprep.subr.mxu0 0.0
  %1003 = vmatpush2.msra.mxu0 0.0
  %1004 = vmatprep.subr.mxu0 0.0
  %1005 = vmatpush2.msra.mxu0 0.0
  %1006 = vmatprep.mubr.f32.mxu0 0.0
  %1007 = vmatmul.mubr.f32.gmra.mxu0 %v940
  %v1008 = vpop.f32.mrf.mxu0
  %v1009 = vadd.f32 %v33, %v1008
  %v1010 = vpop.f32.mrf.mxu0
  %1011 = vdwg.mxu0
  %v1012 = vsel %vm115, %v933, 0
  %1014 = vmatprep.subr.mxu0 0.0
  %1015 = vmatpush1.msra.mxu0 0.0
  %1016 = vmatprep.subr.mxu0 0.0
  %1017 = vmatpush1.msra.mxu0 0.0
  %1018 = vmatprep.subr.mxu0 0.0
  %1019 = vmatpush1.msra.mxu0 0.0
  %1020 = vmatprep.subr.mxu0 0.0
  %1021 = vmatpush1.msra.mxu0 0.0
  %1022 = vmatprep.subr.mxu0 0.0
  %1023 = vmatpush1.msra.mxu0 0.0
  %1024 = vmatprep.subr.mxu0 0.0
  %1025 = vmatpush1.msra.mxu0 0.0
  %1026 = vmatprep.subr.mxu0 0.0
  %1027 = vmatpush1.msra.mxu0 0.0
  %1028 = vmatprep.subr.mxu0 0.0
  %1029 = vmatpush1.msra.mxu0 0.0
  %1030 = vmatprep.subr.mxu0 0.0
  %1031 = vmatpush1.msra.mxu0 0.0
  %1032 = vmatprep.subr.mxu0 0.0
  %1033 = vmatpush1.msra.mxu0 0.0
  %1034 = vmatprep.subr.mxu0 0.0
  %1035 = vmatpush1.msra.mxu0 0.0
  %1036 = vmatprep.subr.mxu0 0.0
  %1037 = vmatpush1.msra.mxu0 0.0
  %1038 = vmatprep.subr.mxu0 0.0
  %1039 = vmatpush1.msra.mxu0 %v26
  %1040 = vmatprep.subr.mxu0 0.0
  %1041 = vmatpush1.msra.mxu0 %v25
  %1042 = vmatprep.subr.mxu0 0.0
  %1043 = vmatpush1.msra.mxu0 %v24
  %1044 = vmatprep.subr.mxu0 0.0
  %1045 = vmatpush1.msra.mxu0 %v23
  %1046 = vmatprep.subr.mxu0 0.0
  %1047 = vmatpush2.msra.mxu0 0.0
  %1048 = vmatprep.subr.mxu0 0.0
  %1049 = vmatpush2.msra.mxu0 0.0
  %1050 = vmatprep.subr.mxu0 0.0
  %1051 = vmatpush2.msra.mxu0 0.0
  %1052 = vmatprep.subr.mxu0 0.0
  %1053 = vmatpush2.msra.mxu0 0.0
  %1054 = vmatprep.subr.mxu0 0.0
  %1055 = vmatpush2.msra.mxu0 0.0
  %1056 = vmatprep.subr.mxu0 0.0
  %1057 = vmatpush2.msra.mxu0 0.0
  %1058 = vmatprep.subr.mxu0 0.0
  %1059 = vmatpush2.msra.mxu0 0.0
  %1060 = vmatprep.subr.mxu0 0.0
  %1061 = vmatpush2.msra.mxu0 0.0
  %1062 = vmatprep.subr.mxu0 0.0
  %1063 = vmatpush2.msra.mxu0 0.0
  %1064 = vmatprep.subr.mxu0 0.0
  %1065 = vmatpush2.msra.mxu0 0.0
  %1066 = vmatprep.subr.mxu0 0.0
  %1067 = vmatpush2.msra.mxu0 0.0
  %1068 = vmatprep.subr.mxu0 0.0
  %1069 = vmatpush2.msra.mxu0 0.0
  %1070 = vmatprep.subr.mxu0 0.0
  %1071 = vmatpush2.msra.mxu0 0.0
  %1072 = vmatprep.subr.mxu0 0.0
  %1073 = vmatpush2.msra.mxu0 0.0
  %1074 = vmatprep.subr.mxu0 0.0
  %1075 = vmatpush2.msra.mxu0 0.0
  %1076 = vmatprep.subr.mxu0 0.0
  %1077 = vmatpush2.msra.mxu0 0.0
  %1078 = vmatprep.mubr.f32.mxu0 0.0
  %1079 = vmatmul.mubr.f32.gmra.mxu0 %v1012
  %v1080 = vpop.f32.mrf.mxu0
  %v1081 = vadd.f32 %v113, %v1080
  %v1082 = vpop.f32.mrf.mxu0
  %1083 = vdwg.mxu0
  %v1084 = vadd.f32 %v1009, %v1081
  %v1085 = vxor.u32 %v1084, 2147483648
  %v1086 = vmul.f32 %v1085, 1.442695
  %v1087 = vpow.pop %v1086
  %v1088 = vadd.f32 %v1087, 1.0
  %v1089 = vrcp.pop %v1088
  %v1090 = vmul.f32 1.0, %v1089
  %1092 = vrot.lane.b32.xlu0 %v1081, 64
  %v1093 = vpop.permute.xlu0 %1092
  %v1095 = vmul.f32 %v1090, %v1093
  %1097 = vrot.lane.b32.xlu0 %v1095, 64
  %v1098 = vpop.permute.xlu0 %1097
  %v1100 = vadd.f32 %v1009, %v1098
  %v1101 = vtanh.pop %v1100
  %v1102 = vsub.f32 1.0, %v1090
  %1104 = vrot.lane.b32.xlu0 %v1101, 96
  %v1105 = vpop.permute.xlu0 %1104
  %v1107 = vmul.f32 %v1102, %v1105
  %v1108 = vmul.f32 %v1090, %v930
  %v1109 = vadd.f32 %v1107, %v1108
  %1111 = vrot.lane.b32.xlu0 %v1109, 96
  %v1112 = vpop.permute.xlu0 %1111
  %s1114 = scalar_lea.vmem %s5, 10
  %1115 = vst.msk [vmem:[%s1114] sm:$0x3] %vm219, %v1112
  %s1116 = scalar_lea.vmem %s0, 12
  %v1117 = vld [vmem:[%s1116] sm:$0x3]
  %v1119 = vsel %vm35, %v1117, 0
  %1121 = vmatprep.subr.mxu0 0.0
  %1122 = vmatpush1.msra.mxu0 0.0
  %1123 = vmatprep.subr.mxu0 0.0
  %1124 = vmatpush1.msra.mxu0 0.0
  %1125 = vmatprep.subr.mxu0 0.0
  %1126 = vmatpush1.msra.mxu0 0.0
  %1127 = vmatprep.subr.mxu0 0.0
  %1128 = vmatpush1.msra.mxu0 0.0
  %1129 = vmatprep.subr.mxu0 0.0
  %1130 = vmatpush1.msra.mxu0 0.0
  %1131 = vmatprep.subr.mxu0 0.0
  %1132 = vmatpush1.msra.mxu0 0.0
  %1133 = vmatprep.subr.mxu0 0.0
  %1134 = vmatpush1.msra.mxu0 0.0
  %1135 = vmatprep.subr.mxu0 0.0
  %1136 = vmatpush1.msra.mxu0 0.0
  %1137 = vmatprep.subr.mxu0 0.0
  %1138 = vmatpush1.msra.mxu0 0.0
  %1139 = vmatprep.subr.mxu0 0.0
  %1140 = vmatpush1.msra.mxu0 0.0
  %1141 = vmatprep.subr.mxu0 0.0
  %1142 = vmatpush1.msra.mxu0 0.0
  %1143 = vmatprep.subr.mxu0 0.0
  %1144 = vmatpush1.msra.mxu0 0.0
  %1145 = vmatprep.subr.mxu0 0.0
  %1146 = vmatpush1.msra.mxu0 0.0
  %1147 = vmatprep.subr.mxu0 0.0
  %1148 = vmatpush1.msra.mxu0 0.0
  %1149 = vmatprep.subr.mxu0 0.0
  %1150 = vmatpush1.msra.mxu0 %v21
  %1151 = vmatprep.subr.mxu0 0.0
  %1152 = vmatpush1.msra.mxu0 %v20
  %1153 = vmatprep.subr.mxu0 0.0
  %1154 = vmatpush2.msra.mxu0 0.0
  %1155 = vmatprep.subr.mxu0 0.0
  %1156 = vmatpush2.msra.mxu0 0.0
  %1157 = vmatprep.subr.mxu0 0.0
  %1158 = vmatpush2.msra.mxu0 0.0
  %1159 = vmatprep.subr.mxu0 0.0
  %1160 = vmatpush2.msra.mxu0 0.0
  %1161 = vmatprep.subr.mxu0 0.0
  %1162 = vmatpush2.msra.mxu0 0.0
  %1163 = vmatprep.subr.mxu0 0.0
  %1164 = vmatpush2.msra.mxu0 0.0
  %1165 = vmatprep.subr.mxu0 0.0
  %1166 = vmatpush2.msra.mxu0 0.0
  %1167 = vmatprep.subr.mxu0 0.0
  %1168 = vmatpush2.msra.mxu0 0.0
  %1169 = vmatprep.subr.mxu0 0.0
  %1170 = vmatpush2.msra.mxu0 0.0
  %1171 = vmatprep.subr.mxu0 0.0
  %1172 = vmatpush2.msra.mxu0 0.0
  %1173 = vmatprep.subr.mxu0 0.0
  %1174 = vmatpush2.msra.mxu0 0.0
  %1175 = vmatprep.subr.mxu0 0.0
  %1176 = vmatpush2.msra.mxu0 0.0
  %1177 = vmatprep.subr.mxu0 0.0
  %1178 = vmatpush2.msra.mxu0 0.0
  %1179 = vmatprep.subr.mxu0 0.0
  %1180 = vmatpush2.msra.mxu0 0.0
  %1181 = vmatprep.subr.mxu0 0.0
  %1182 = vmatpush2.msra.mxu0 0.0
  %1183 = vmatprep.subr.mxu0 0.0
  %1184 = vmatpush2.msra.mxu0 0.0
  %1185 = vmatprep.mubr.f32.mxu0 0.0
  %1186 = vmatmul.mubr.f32.gmra.mxu0 %v1119
  %v1187 = vpop.f32.mrf.mxu0
  %v1188 = vadd.f32 %v33, %v1187
  %v1189 = vpop.f32.mrf.mxu0
  %1190 = vdwg.mxu0
  %v1191 = vsel %vm115, %v1112, 0
  %1193 = vmatprep.subr.mxu0 0.0
  %1194 = vmatpush1.msra.mxu0 0.0
  %1195 = vmatprep.subr.mxu0 0.0
  %1196 = vmatpush1.msra.mxu0 0.0
  %1197 = vmatprep.subr.mxu0 0.0
  %1198 = vmatpush1.msra.mxu0 0.0
  %1199 = vmatprep.subr.mxu0 0.0
  %1200 = vmatpush1.msra.mxu0 0.0
  %1201 = vmatprep.subr.mxu0 0.0
  %1202 = vmatpush1.msra.mxu0 0.0
  %1203 = vmatprep.subr.mxu0 0.0
  %1204 = vmatpush1.msra.mxu0 0.0
  %1205 = vmatprep.subr.mxu0 0.0
  %1206 = vmatpush1.msra.mxu0 0.0
  %1207 = vmatprep.subr.mxu0 0.0
  %1208 = vmatpush1.msra.mxu0 0.0
  %1209 = vmatprep.subr.mxu0 0.0
  %1210 = vmatpush1.msra.mxu0 0.0
  %1211 = vmatprep.subr.mxu0 0.0
  %1212 = vmatpush1.msra.mxu0 0.0
  %1213 = vmatprep.subr.mxu0 0.0
  %1214 = vmatpush1.msra.mxu0 0.0
  %1215 = vmatprep.subr.mxu0 0.0
  %1216 = vmatpush1.msra.mxu0 0.0
  %1217 = vmatprep.subr.mxu0 0.0
  %1218 = vmatpush1.msra.mxu0 %v26
  %1219 = vmatprep.subr.mxu0 0.0
  %1220 = vmatpush1.msra.mxu0 %v25
  %1221 = vmatprep.subr.mxu0 0.0
  %1222 = vmatpush1.msra.mxu0 %v24
  %1223 = vmatprep.subr.mxu0 0.0
  %1224 = vmatpush1.msra.mxu0 %v23
  %1225 = vmatprep.subr.mxu0 0.0
  %1226 = vmatpush2.msra.mxu0 0.0
  %1227 = vmatprep.subr.mxu0 0.0
  %1228 = vmatpush2.msra.mxu0 0.0
  %1229 = vmatprep.subr.mxu0 0.0
  %1230 = vmatpush2.msra.mxu0 0.0
  %1231 = vmatprep.subr.mxu0 0.0
  %1232 = vmatpush2.msra.mxu0 0.0
  %1233 = vmatprep.subr.mxu0 0.0
  %1234 = vmatpush2.msra.mxu0 0.0
  %1235 = vmatprep.subr.mxu0 0.0
  %1236 = vmatpush2.msra.mxu0 0.0
  %1237 = vmatprep.subr.mxu0 0.0
  %1238 = vmatpush2.msra.mxu0 0.0
  %1239 = vmatprep.subr.mxu0 0.0
  %1240 = vmatpush2.msra.mxu0 0.0
  %1241 = vmatprep.subr.mxu0 0.0
  %1242 = vmatpush2.msra.mxu0 0.0
  %1243 = vmatprep.subr.mxu0 0.0
  %1244 = vmatpush2.msra.mxu0 0.0
  %1245 = vmatprep.subr.mxu0 0.0
  %1246 = vmatpush2.msra.mxu0 0.0
  %1247 = vmatprep.subr.mxu0 0.0
  %1248 = vmatpush2.msra.mxu0 0.0
  %1249 = vmatprep.subr.mxu0 0.0
  %1250 = vmatpush2.msra.mxu0 0.0
  %1251 = vmatprep.subr.mxu0 0.0
  %1252 = vmatpush2.msra.mxu0 0.0
  %1253 = vmatprep.subr.mxu0 0.0
  %1254 = vmatpush2.msra.mxu0 0.0
  %1255 = vmatprep.subr.mxu0 0.0
  %1256 = vmatpush2.msra.mxu0 0.0
  %1257 = vmatprep.mubr.f32.mxu0 0.0
  %1258 = vmatmul.mubr.f32.gmra.mxu0 %v1191
  %v1259 = vpop.f32.mrf.mxu0
  %v1260 = vadd.f32 %v113, %v1259
  %v1261 = vpop.f32.mrf.mxu0
  %1262 = vdwg.mxu0
  %v1263 = vadd.f32 %v1188, %v1260
  %v1264 = vxor.u32 %v1263, 2147483648
  %v1265 = vmul.f32 %v1264, 1.442695
  %v1266 = vpow.pop %v1265
  %v1267 = vadd.f32 %v1266, 1.0
  %v1268 = vrcp.pop %v1267
  %v1269 = vmul.f32 1.0, %v1268
  %1271 = vrot.lane.b32.xlu0 %v1260, 64
  %v1272 = vpop.permute.xlu0 %1271
  %v1274 = vmul.f32 %v1269, %v1272
  %1276 = vrot.lane.b32.xlu0 %v1274, 64
  %v1277 = vpop.permute.xlu0 %1276
  %v1279 = vadd.f32 %v1188, %v1277
  %v1280 = vtanh.pop %v1279
  %v1281 = vsub.f32 1.0, %v1269
  %1283 = vrot.lane.b32.xlu0 %v1280, 96
  %v1284 = vpop.permute.xlu0 %1283
  %v1286 = vmul.f32 %v1281, %v1284
  %v1287 = vmul.f32 %v1269, %v1109
  %v1288 = vadd.f32 %v1286, %v1287
  %1290 = vrot.lane.b32.xlu0 %v1288, 96
  %v1291 = vpop.permute.xlu0 %1290
  %s1293 = scalar_lea.vmem %s5, 12
  %1294 = vst.msk [vmem:[%s1293] sm:$0x3] %vm219, %v1291
  %s1295 = scalar_lea.vmem %s0, 14
  %v1296 = vld [vmem:[%s1295] sm:$0x3]
  %v1298 = vsel %vm35, %v1296, 0
  %1300 = vmatprep.subr.mxu0 0.0
  %1301 = vmatpush1.msra.mxu0 0.0
  %1302 = vmatprep.subr.mxu0 0.0
  %1303 = vmatpush1.msra.mxu0 0.0
  %1304 = vmatprep.subr.mxu0 0.0
  %1305 = vmatpush1.msra.mxu0 0.0
  %1306 = vmatprep.subr.mxu0 0.0
  %1307 = vmatpush1.msra.mxu0 0.0
  %1308 = vmatprep.subr.mxu0 0.0
  %1309 = vmatpush1.msra.mxu0 0.0
  %1310 = vmatprep.subr.mxu0 0.0
  %1311 = vmatpush1.msra.mxu0 0.0
  %1312 = vmatprep.subr.mxu0 0.0
  %1313 = vmatpush1.msra.mxu0 0.0
  %1314 = vmatprep.subr.mxu0 0.0
  %1315 = vmatpush1.msra.mxu0 0.0
  %1316 = vmatprep.subr.mxu0 0.0
  %1317 = vmatpush1.msra.mxu0 0.0
  %1318 = vmatprep.subr.mxu0 0.0
  %1319 = vmatpush1.msra.mxu0 0.0
  %1320 = vmatprep.subr.mxu0 0.0
  %1321 = vmatpush1.msra.mxu0 0.0
  %1322 = vmatprep.subr.mxu0 0.0
  %1323 = vmatpush1.msra.mxu0 0.0
  %1324 = vmatprep.subr.mxu0 0.0
  %1325 = vmatpush1.msra.mxu0 0.0
  %1326 = vmatprep.subr.mxu0 0.0
  %1327 = vmatpush1.msra.mxu0 0.0
  %1328 = vmatprep.subr.mxu0 0.0
  %1329 = vmatpush1.msra.mxu0 %v21
  %1330 = vmatprep.subr.mxu0 0.0
  %1331 = vmatpush1.msra.mxu0 %v20
  %1332 = vmatprep.subr.mxu0 0.0
  %1333 = vmatpush2.msra.mxu0 0.0
  %1334 = vmatprep.subr.mxu0 0.0
  %1335 = vmatpush2.msra.mxu0 0.0
  %1336 = vmatprep.subr.mxu0 0.0
  %1337 = vmatpush2.msra.mxu0 0.0
  %1338 = vmatprep.subr.mxu0 0.0
  %1339 = vmatpush2.msra.mxu0 0.0
  %1340 = vmatprep.subr.mxu0 0.0
  %1341 = vmatpush2.msra.mxu0 0.0
  %1342 = vmatprep.subr.mxu0 0.0
  %1343 = vmatpush2.msra.mxu0 0.0
  %1344 = vmatprep.subr.mxu0 0.0
  %1345 = vmatpush2.msra.mxu0 0.0
  %1346 = vmatprep.subr.mxu0 0.0
  %1347 = vmatpush2.msra.mxu0 0.0
  %1348 = vmatprep.subr.mxu0 0.0
  %1349 = vmatpush2.msra.mxu0 0.0
  %1350 = vmatprep.subr.mxu0 0.0
  %1351 = vmatpush2.msra.mxu0 0.0
  %1352 = vmatprep.subr.mxu0 0.0
  %1353 = vmatpush2.msra.mxu0 0.0
  %1354 = vmatprep.subr.mxu0 0.0
  %1355 = vmatpush2.msra.mxu0 0.0
  %1356 = vmatprep.subr.mxu0 0.0
  %1357 = vmatpush2.msra.mxu0 0.0
  %1358 = vmatprep.subr.mxu0 0.0
  %1359 = vmatpush2.msra.mxu0 0.0
  %1360 = vmatprep.subr.mxu0 0.0
  %1361 = vmatpush2.msra.mxu0 0.0
  %1362 = vmatprep.subr.mxu0 0.0
  %1363 = vmatpush2.msra.mxu0 0.0
  %1364 = vmatprep.mubr.f32.mxu0 0.0
  %1365 = vmatmul.mubr.f32.gmra.mxu0 %v1298
  %v1366 = vpop.f32.mrf.mxu0
  %v1367 = vadd.f32 %v33, %v1366
  %v1368 = vpop.f32.mrf.mxu0
  %1369 = vdwg.mxu0
  %v1370 = vsel %vm115, %v1291, 0
  %1372 = vmatprep.subr.mxu0 0.0
  %1373 = vmatpush1.msra.mxu0 0.0
  %1374 = vmatprep.subr.mxu0 0.0
  %1375 = vmatpush1.msra.mxu0 0.0
  %1376 = vmatprep.subr.mxu0 0.0
  %1377 = vmatpush1.msra.mxu0 0.0
  %1378 = vmatprep.subr.mxu0 0.0
  %1379 = vmatpush1.msra.mxu0 0.0
  %1380 = vmatprep.subr.mxu0 0.0
  %1381 = vmatpush1.msra.mxu0 0.0
  %1382 = vmatprep.subr.mxu0 0.0
  %1383 = vmatpush1.msra.mxu0 0.0
  %1384 = vmatprep.subr.mxu0 0.0
  %1385 = vmatpush1.msra.mxu0 0.0
  %1386 = vmatprep.subr.mxu0 0.0
  %1387 = vmatpush1.msra.mxu0 0.0
  %1388 = vmatprep.subr.mxu0 0.0
  %1389 = vmatpush1.msra.mxu0 0.0
  %1390 = vmatprep.subr.mxu0 0.0
  %1391 = vmatpush1.msra.mxu0 0.0
  %1392 = vmatprep.subr.mxu0 0.0
  %1393 = vmatpush1.msra.mxu0 0.0
  %1394 = vmatprep.subr.mxu0 0.0
  %1395 = vmatpush1.msra.mxu0 0.0
  %1396 = vmatprep.subr.mxu0 0.0
  %1397 = vmatpush1.msra.mxu0 %v26
  %1398 = vmatprep.subr.mxu0 0.0
  %1399 = vmatpush1.msra.mxu0 %v25
  %1400 = vmatprep.subr.mxu0 0.0
  %1401 = vmatpush1.msra.mxu0 %v24
  %1402 = vmatprep.subr.mxu0 0.0
  %1403 = vmatpush1.msra.mxu0 %v23
  %1404 = vmatprep.subr.mxu0 0.0
  %1405 = vmatpush2.msra.mxu0 0.0
  %1406 = vmatprep.subr.mxu0 0.0
  %1407 = vmatpush2.msra.mxu0 0.0
  %1408 = vmatprep.subr.mxu0 0.0
  %1409 = vmatpush2.msra.mxu0 0.0
  %1410 = vmatprep.subr.mxu0 0.0
  %1411 = vmatpush2.msra.mxu0 0.0
  %1412 = vmatprep.subr.mxu0 0.0
  %1413 = vmatpush2.msra.mxu0 0.0
  %1414 = vmatprep.subr.mxu0 0.0
  %1415 = vmatpush2.msra.mxu0 0.0
  %1416 = vmatprep.subr.mxu0 0.0
  %1417 = vmatpush2.msra.mxu0 0.0
  %1418 = vmatprep.subr.mxu0 0.0
  %1419 = vmatpush2.msra.mxu0 0.0
  %1420 = vmatprep.subr.mxu0 0.0
  %1421 = vmatpush2.msra.mxu0 0.0
  %1422 = vmatprep.subr.mxu0 0.0
  %1423 = vmatpush2.msra.mxu0 0.0
  %1424 = vmatprep.subr.mxu0 0.0
  %1425 = vmatpush2.msra.mxu0 0.0
  %1426 = vmatprep.subr.mxu0 0.0
  %1427 = vmatpush2.msra.mxu0 0.0
  %1428 = vmatprep.subr.mxu0 0.0
  %1429 = vmatpush2.msra.mxu0 0.0
  %1430 = vmatprep.subr.mxu0 0.0
  %1431 = vmatpush2.msra.mxu0 0.0
  %1432 = vmatprep.subr.mxu0 0.0
  %1433 = vmatpush2.msra.mxu0 0.0
  %1434 = vmatprep.subr.mxu0 0.0
  %1435 = vmatpush2.msra.mxu0 0.0
  %1436 = vmatprep.mubr.f32.mxu0 0.0
  %1437 = vmatmul.mubr.f32.gmra.mxu0 %v1370
  %v1438 = vpop.f32.mrf.mxu0
  %v1439 = vadd.f32 %v113, %v1438
  %v1440 = vpop.f32.mrf.mxu0
  %1441 = vdwg.mxu0
  %v1442 = vadd.f32 %v1367, %v1439
  %v1443 = vxor.u32 %v1442, 2147483648
  %v1444 = vmul.f32 %v1443, 1.442695
  %v1445 = vpow.pop %v1444
  %v1446 = vadd.f32 %v1445, 1.0
  %v1447 = vrcp.pop %v1446
  %v1448 = vmul.f32 1.0, %v1447
  %1450 = vrot.lane.b32.xlu0 %v1439, 64
  %v1451 = vpop.permute.xlu0 %1450
  %v1453 = vmul.f32 %v1448, %v1451
  %1455 = vrot.lane.b32.xlu0 %v1453, 64
  %v1456 = vpop.permute.xlu0 %1455
  %v1458 = vadd.f32 %v1367, %v1456
  %v1459 = vtanh.pop %v1458
  %v1460 = vsub.f32 1.0, %v1448
  %1462 = vrot.lane.b32.xlu0 %v1459, 96
  %v1463 = vpop.permute.xlu0 %1462
  %v1465 = vmul.f32 %v1460, %v1463
  %v1466 = vmul.f32 %v1448, %v1288
  %v1467 = vadd.f32 %v1465, %v1466
  %1469 = vrot.lane.b32.xlu0 %v1467, 96
  %v1470 = vpop.permute.xlu0 %1469
  %s1472 = scalar_lea.vmem %s5, 14
  %1473 = vst.msk [vmem:[%s1472] sm:$0x3] %vm219, %v1470
  // Predicated region
  $region22: #{rnn_forward.1} parent=0 // pred_check
    _
  $region23: #{rnn_forward.1} parent=0 // pred_check_branch
    %1475 = sbr.rel (0) target = $region25
  $region24: #{rnn_forward.1} parent=0 // pred_region
    _
  $region25: #{rnn_forward.1} parent=0 // pred_fallthru
    _
  // Predicated region
  $region26: #{rnn_forward.1} parent=0 // pred_check
    _
  $region27: #{rnn_forward.1} parent=0 // pred_check_branch
    %1477 = sbr.rel (0) target = $region29
  $region28: #{rnn_forward.1} parent=0 // pred_region
    _
  $region29: #{rnn_forward.1} parent=0 // pred_fallthru
    _

</llo_original>
